<compile_context>
chip_gen: v5e
topology: v5e:2x2
jax: 0.10.0
libtpu: 0.0.40
codegen_flags: <defaults>
</compile_context>

<pallas_src>
import jax
import jax.numpy as jnp
from jax import lax
from jax.experimental import pallas as pl
from jax.experimental.pallas import tpu as pltpu

EMBED_DIM = 32
NUM_HEADS = 8
HEAD_DIM = EMBED_DIM // NUM_HEADS


# ----------------------------------------------------------------------------
# Fused MHA kernel: one batch element per grid step, everything in VMEM/vregs.
# ----------------------------------------------------------------------------
def _make_mha_kernel(num_heads, has_past, emit_kv):
    def kernel(*refs):
        (q_ref, k_ref, v_ref,
         wq_ref, wk_ref, wv_ref, wo_ref,
         bq_ref, bk_ref, bv_ref, bo_ref) = refs[:11]
        i = 11
        if has_past:
            pk_ref, pv_ref = refs[i], refs[i + 1]
            i += 2
        o_ref = refs[i]
        if emit_kv:
            ko_ref, vo_ref = refs[i + 1], refs[i + 2]

        xq = q_ref[0]                      # (Tq, C)
        xk = k_ref[0]                      # (Tk_new, C)
        xv = v_ref[0]                      # (Tk_new, C)

        C = xq.shape[-1]
        head_dim = C // num_heads
        scale = float(head_dim) ** -0.5

        # Projections: full-width (T, C) x (C, C) MXU matmuls, f32 accumulate.
        q = jnp.dot(xq, wq_ref[...],
                    preferred_element_type=jnp.float32) + bq_ref[...]
        q = q * scale                      # fold 1/sqrt(d_k) into q
        k = jnp.dot(xk, wk_ref[...],
                    preferred_element_type=jnp.float32) + bk_ref[...]
        v = jnp.dot(xv, wv_ref[...],
                    preferred_element_type=jnp.float32) + bv_ref[...]

        if has_past:                       # prepend cached keys/values (rows)
            k = jnp.concatenate([pk_ref[0].astype(jnp.float32), k], axis=0)
            v = jnp.concatenate([pv_ref[0].astype(jnp.float32), v], axis=0)

        wo = wo_ref[...]                   # (C, C)

        # Per-head attention, heads fully unrolled (H small).  The output
        # projection is fused head-by-head so the result is built directly
        # in the lane-dense (Tq, C) layout -> full-width store.
        out = jnp.zeros((xq.shape[0], C), jnp.float32)
        for h in range(num_heads):
            sl = slice(h * head_dim, (h + 1) * head_dim)
            qh = q[:, sl]                  # (Tq, Dh)
            kh = k[:, sl]                  # (Tk, Dh)
            vh = v[:, sl]                  # (Tk, Dh)
            # scores: contract last axes of q and k (no explicit transpose)
            s = lax.dot_general(qh, kh, (((1,), (1,)), ((), ())),
                                preferred_element_type=jnp.float32)  # (Tq,Tk)
            m = jnp.max(s, axis=-1, keepdims=True)
            e = jnp.exp(s - m)
            attn = e / jnp.sum(e, axis=-1, keepdims=True)
            ctx_h = jnp.dot(attn, vh,
                            preferred_element_type=jnp.float32)      # (Tq,Dh)
            out = out + jnp.dot(ctx_h, wo[sl, :],
                                preferred_element_type=jnp.float32)  # (Tq,C)
        out = out + bo_ref[...]
        o_ref[0] = out.astype(o_ref.dtype)

        if emit_kv:                        # lane-dense KV-cache writeback
            ko_ref[0] = k.astype(ko_ref.dtype)
            vo_ref[0] = v.astype(vo_ref.dtype)

    return kernel


# ----------------------------------------------------------------------------
# Wrapper (glue + parameter init)
# ----------------------------------------------------------------------------
def init_mha_params(key, embed_dim=EMBED_DIM):
    ks = jax.random.split(key, 8)
    scale = 0.02
    params = {}
    for i, name in enumerate(["q_proj", "k_proj", "v_proj", "out_proj"]):
        # weight stored as (in, out) so the kernel does x @ W directly
        params[name + "_w"] = scale * jax.random.normal(
            ks[2 * i], (embed_dim, embed_dim), jnp.float32)
        params[name + "_b"] = scale * jax.random.normal(
            ks[2 * i + 1], (1, embed_dim), jnp.float32)
    return params


def multi_head_attention(params, query, key, value,
                         past_kv=None, use_cache=False,
                         num_heads=NUM_HEADS):
    B, Tq, C = query.shape
    Tk_new = key.shape[1]
    head_dim = C // num_heads
    has_past = past_kv is not None

    inputs = [query, key, value,
              params["q_proj_w"], params["k_proj_w"],
              params["v_proj_w"], params["out_proj_w"],
              params["q_proj_b"], params["k_proj_b"],
              params["v_proj_b"], params["out_proj_b"]]

    w_spec = pl.BlockSpec((C, C), lambda b: (0, 0))
    b_spec = pl.BlockSpec((1, C), lambda b: (0, 0))
    in_specs = [
        pl.BlockSpec((1, Tq, C), lambda b: (b, 0, 0)),
        pl.BlockSpec((1, Tk_new, C), lambda b: (b, 0, 0)),
        pl.BlockSpec((1, Tk_new, C), lambda b: (b, 0, 0)),
        w_spec, w_spec, w_spec, w_spec,
        b_spec, b_spec, b_spec, b_spec,
    ]

    Tk_total = Tk_new
    if has_past:
        pk, pv = past_kv                          # [B, H, Tp, Dh] (torch layout)
        Tp = pk.shape[2]
        Tk_total = Tp + Tk_new
        # lane-dense [B, Tp, C] layout for the cache inside the kernel
        pk_flat = pk.transpose(0, 2, 1, 3).reshape(B, Tp, C)
        pv_flat = pv.transpose(0, 2, 1, 3).reshape(B, Tp, C)
        inputs += [pk_flat, pv_flat]
        p_spec = pl.BlockSpec((1, Tp, C), lambda b: (b, 0, 0))
        in_specs += [p_spec, p_spec]

    out_shapes = [jax.ShapeDtypeStruct((B, Tq, C), query.dtype)]
    out_specs = [pl.BlockSpec((1, Tq, C), lambda b: (b, 0, 0))]
    if use_cache:
        kv_spec = pl.BlockSpec((1, Tk_total, C), lambda b: (b, 0, 0))
        out_shapes += [jax.ShapeDtypeStruct((B, Tk_total, C), query.dtype)] * 2
        out_specs += [kv_spec, kv_spec]

    kernel = _make_mha_kernel(num_heads, has_past, use_cache)

    result = pl.pallas_call(
        kernel,
        out_shape=tuple(out_shapes) if use_cache else out_shapes[0],
        grid=(B,),
        in_specs=in_specs,
        out_specs=tuple(out_specs) if use_cache else out_specs[0],
        compiler_params=pltpu.CompilerParams(
            dimension_semantics=("parallel",)),   # v7x: each TC takes a batch
    )(*inputs)

    if use_cache:
        out, k_flat, v_flat = result
        # return next_kv in the torch layout [B, H, Tk, Dh]
        k_cache = k_flat.reshape(B, Tk_total, num_heads,
                                 head_dim).transpose(0, 2, 1, 3)
        v_cache = v_flat.reshape(B, Tk_total, num_heads,
                                 head_dim).transpose(0, 2, 1, 3)
        return out, (k_cache, v_cache)
    return result, None


# ----------------------------------------------------------------------------
# Plain-JAX reference for correctness check
# ----------------------------------------------------------------------------
def reference_mha(params, query, key, value, past_kv=None,
                  num_heads=NUM_HEADS):
    B, T, C = query.shape
    head_dim = C // num_heads

    def lin(x, w, b):
        return x @ w + b

    def shape(x):
        return x.reshape(B, -1, num_heads, head_dim).transpose(0, 2, 1, 3)

    q = shape(lin(query, params["q_proj_w"], params["q_proj_b"]))
    k = shape(lin(key, params["k_proj_w"], params["k_proj_b"]))
    v = shape(lin(value, params["v_proj_w"], params["v_proj_b"]))
    if past_kv is not None:
        pk, pv = past_kv
        k = jnp.concatenate([pk, k], axis=2)
        v = jnp.concatenate([pv, v], axis=2)
    scores = jnp.einsum("bhqd,bhkd->bhqk", q, k) / jnp.sqrt(
        jnp.float32(head_dim))
    attn = jax.nn.softmax(scores, axis=-1)
    out = jnp.einsum("bhqk,bhkd->bhqd", attn, v)
    out = out.transpose(0, 2, 1, 3).reshape(B, T, C)
    return lin(out, params["out_proj_w"], params["out_proj_b"])


if __name__ == "__main__":
    B, T, C = 2, 8, EMBED_DIM
    root = jax.random.PRNGKey(0)
    k_params, k_q, k_k, k_v, k_q2, k_k2, k_v2 = jax.random.split(root, 7)

    params = init_mha_params(k_params, C)
    query = jax.random.normal(k_q, (B, T, C), jnp.float32)
    key_in = jax.random.normal(k_k, (B, T, C), jnp.float32)
    value = jax.random.normal(k_v, (B, T, C), jnp.float32)

    # 1) plain forward (no cache)
    out, next_kv = multi_head_attention(params, query, key_in, value,
                                        past_kv=None, use_cache=False)
    out = jax.block_until_ready(out)
    ref = reference_mha(params, query, key_in, value)
    assert out.shape == (B, T, C)
    assert next_kv is None
    assert jnp.allclose(out, ref, atol=1e-5, rtol=1e-5), "mismatch (no cache)"

    # 2) use_cache=True: same output + KV cache in torch [B, H, Tk, Dh] layout
    out_c, (k_cache, v_cache) = multi_head_attention(
        params, query, key_in, value, past_kv=None, use_cache=True)
    jax.block_until_ready(out_c)
    assert k_cache.shape == (B, NUM_HEADS, T, HEAD_DIM)
    assert v_cache.shape == (B, NUM_HEADS, T, HEAD_DIM)
    assert jnp.allclose(out_c, ref, atol=1e-5, rtol=1e-5), "mismatch (cache)"

    # 3) feed the cache back in as past_kv
    query2 = jax.random.normal(k_q2, (B, T, C), jnp.float32)
    key2 = jax.random.normal(k_k2, (B, T, C), jnp.float32)
    value2 = jax.random.normal(k_v2, (B, T, C), jnp.float32)
    out2, _ = multi_head_attention(params, query2, key2, value2,
                                   past_kv=(k_cache, v_cache),
                                   use_cache=False)
    out2 = jax.block_until_ready(out2)
    ref2 = reference_mha(params, query2, key2, value2,
                         past_kv=(k_cache, v_cache))
    assert jnp.allclose(out2, ref2, atol=1e-5, rtol=1e-5), "mismatch (past_kv)"

    print("KERNEL_OK")
</pallas_src>

<mosaic_0001>
module attributes {stable_mosaic.version = 11 : i64} {
  func.func @kernel(%arg0: i32, %arg1: memref<1x8x32xf32, #tpu.memory_space<vmem>>, %arg2: memref<1x8x32xf32, #tpu.memory_space<vmem>>, %arg3: memref<1x8x32xf32, #tpu.memory_space<vmem>>, %arg4: memref<32x32xf32, #tpu.memory_space<vmem>>, %arg5: memref<32x32xf32, #tpu.memory_space<vmem>>, %arg6: memref<32x32xf32, #tpu.memory_space<vmem>>, %arg7: memref<32x32xf32, #tpu.memory_space<vmem>>, %arg8: memref<1x32xf32, #tpu.memory_space<vmem>>, %arg9: memref<1x32xf32, #tpu.memory_space<vmem>>, %arg10: memref<1x32xf32, #tpu.memory_space<vmem>>, %arg11: memref<1x32xf32, #tpu.memory_space<vmem>>, %arg12: memref<1x8x32xf32, #tpu.memory_space<vmem>>) attributes {dimension_semantics = [#tpu.dimension_semantics<parallel>], iteration_bounds = array<i64: 2>, scalar_prefetch = 0 : i64, scratch_operands = 0 : i64, tpu.core_type = #tpu.core_type<tc>, window_params = [{transform_indices = @transform_0, window_bounds = array<i64: 1, 8, 32>}, {transform_indices = @transform_1, window_bounds = array<i64: 1, 8, 32>}, {transform_indices = @transform_2, window_bounds = array<i64: 1, 8, 32>}, {pipeline_mode = #tpu.pipeline_mode<synchronous>, transform_indices = @transform_3, window_bounds = array<i64: 32, 32>}, {pipeline_mode = #tpu.pipeline_mode<synchronous>, transform_indices = @transform_4, window_bounds = array<i64: 32, 32>}, {pipeline_mode = #tpu.pipeline_mode<synchronous>, transform_indices = @transform_5, window_bounds = array<i64: 32, 32>}, {pipeline_mode = #tpu.pipeline_mode<synchronous>, transform_indices = @transform_6, window_bounds = array<i64: 32, 32>}, {pipeline_mode = #tpu.pipeline_mode<synchronous>, transform_indices = @transform_7, window_bounds = array<i64: 1, 32>}, {pipeline_mode = #tpu.pipeline_mode<synchronous>, transform_indices = @transform_8, window_bounds = array<i64: 1, 32>}, {pipeline_mode = #tpu.pipeline_mode<synchronous>, transform_indices = @transform_9, window_bounds = array<i64: 1, 32>}, {pipeline_mode = #tpu.pipeline_mode<synchronous>, transform_indices = @transform_10, window_bounds = array<i64: 1, 32>}, {transform_indices = @transform_11, window_bounds = array<i64: 1, 8, 32>}]} {
    %c0 = arith.constant 0 : index
    %c0_0 = arith.constant 0 : index
    %c0_1 = arith.constant 0 : index
    %0 = vector.load %arg1[%c0, %c0_0, %c0_1] : memref<1x8x32xf32, #tpu.memory_space<vmem>>, vector<1x8x32xf32>
    %1 = vector.shape_cast %0 : vector<1x8x32xf32> to vector<8x32xf32>
    %c0_2 = arith.constant 0 : index
    %c0_3 = arith.constant 0 : index
    %c0_4 = arith.constant 0 : index
    %2 = vector.load %arg2[%c0_2, %c0_3, %c0_4] : memref<1x8x32xf32, #tpu.memory_space<vmem>>, vector<1x8x32xf32>
    %3 = vector.shape_cast %2 : vector<1x8x32xf32> to vector<8x32xf32>
    %c0_5 = arith.constant 0 : index
    %c0_6 = arith.constant 0 : index
    %c0_7 = arith.constant 0 : index
    %4 = vector.load %arg3[%c0_5, %c0_6, %c0_7] : memref<1x8x32xf32, #tpu.memory_space<vmem>>, vector<1x8x32xf32>
    %5 = vector.shape_cast %4 : vector<1x8x32xf32> to vector<8x32xf32>
    %c0_8 = arith.constant 0 : index
    %c0_9 = arith.constant 0 : index
    %6 = vector.load %arg4[%c0_8, %c0_9] : memref<32x32xf32, #tpu.memory_space<vmem>>, vector<32x32xf32>
    %cst = arith.constant dense<0.000000e+00> : vector<8x32xf32>
    %7 = tpu.matmul %1, %6, %cst {dimension_numbers = #tpu.dot_dimension_numbers<[1], [0], [0], [1], [0, 0, 1, 1], [], []>} : vector<8x32xf32>, vector<32x32xf32>, vector<8x32xf32> -> vector<8x32xf32>
    %c0_10 = arith.constant 0 : index
    %c0_11 = arith.constant 0 : index
    %8 = vector.load %arg8[%c0_10, %c0_11] : memref<1x32xf32, #tpu.memory_space<vmem>>, vector<1x32xf32>
    %9 = vector.broadcast %8 : vector<1x32xf32> to vector<8x32xf32>
    %10 = arith.addf %7, %9 : vector<8x32xf32>
    %cst_12 = arith.constant 5.000000e-01 : f32
    %11 = vector.broadcast %cst_12 : f32 to vector<8x32xf32>
    %12 = arith.mulf %10, %11 : vector<8x32xf32>
    %c0_13 = arith.constant 0 : index
    %c0_14 = arith.constant 0 : index
    %13 = vector.load %arg5[%c0_13, %c0_14] : memref<32x32xf32, #tpu.memory_space<vmem>>, vector<32x32xf32>
    %cst_15 = arith.constant dense<0.000000e+00> : vector<8x32xf32>
    %14 = tpu.matmul %3, %13, %cst_15 {dimension_numbers = #tpu.dot_dimension_numbers<[1], [0], [0], [1], [0, 0, 1, 1], [], []>} : vector<8x32xf32>, vector<32x32xf32>, vector<8x32xf32> -> vector<8x32xf32>
    %c0_16 = arith.constant 0 : index
    %c0_17 = arith.constant 0 : index
    %15 = vector.load %arg9[%c0_16, %c0_17] : memref<1x32xf32, #tpu.memory_space<vmem>>, vector<1x32xf32>
    %16 = vector.broadcast %15 : vector<1x32xf32> to vector<8x32xf32>
    %17 = arith.addf %14, %16 : vector<8x32xf32>
    %c0_18 = arith.constant 0 : index
    %c0_19 = arith.constant 0 : index
    %18 = vector.load %arg6[%c0_18, %c0_19] : memref<32x32xf32, #tpu.memory_space<vmem>>, vector<32x32xf32>
    %cst_20 = arith.constant dense<0.000000e+00> : vector<8x32xf32>
    %19 = tpu.matmul %5, %18, %cst_20 {dimension_numbers = #tpu.dot_dimension_numbers<[1], [0], [0], [1], [0, 0, 1, 1], [], []>} : vector<8x32xf32>, vector<32x32xf32>, vector<8x32xf32> -> vector<8x32xf32>
    %c0_21 = arith.constant 0 : index
    %c0_22 = arith.constant 0 : index
    %20 = vector.load %arg10[%c0_21, %c0_22] : memref<1x32xf32, #tpu.memory_space<vmem>>, vector<1x32xf32>
    %21 = vector.broadcast %20 : vector<1x32xf32> to vector<8x32xf32>
    %22 = arith.addf %19, %21 : vector<8x32xf32>
    %c0_23 = arith.constant 0 : index
    %c0_24 = arith.constant 0 : index
    %23 = vector.load %arg7[%c0_23, %c0_24] : memref<32x32xf32, #tpu.memory_space<vmem>>, vector<32x32xf32>
    %cst_25 = arith.constant 0.000000e+00 : f32
    %24 = vector.broadcast %cst_25 : f32 to vector<8x32xf32>
    %25 = vector.extract_strided_slice %12 {offsets = [0, 0], sizes = [8, 4], strides = [1, 1]} : vector<8x32xf32> to vector<8x4xf32>
    %26 = vector.extract_strided_slice %17 {offsets = [0, 0], sizes = [8, 4], strides = [1, 1]} : vector<8x32xf32> to vector<8x4xf32>
    %27 = vector.extract_strided_slice %22 {offsets = [0, 0], sizes = [8, 4], strides = [1, 1]} : vector<8x32xf32> to vector<8x4xf32>
    %cst_26 = arith.constant dense<0.000000e+00> : vector<8x8xf32>
    %28 = tpu.matmul %25, %26, %cst_26 {dimension_numbers = #tpu.dot_dimension_numbers<[1], [1], [0], [0], [0, 0, 1, 0], [], []>} : vector<8x4xf32>, vector<8x4xf32>, vector<8x8xf32> -> vector<8x8xf32>
    %cst_27 = arith.constant dense<0xFF800000> : vector<8xf32>
    %29 = vector.multi_reduction <maximumf>, %28, %cst_27 [1] : vector<8x8xf32> to vector<8xf32>
    %30 = vector.shape_cast %29 : vector<8xf32> to vector<8x1xf32>
    %31 = vector.broadcast %30 : vector<8x1xf32> to vector<8x8xf32>
    %32 = arith.subf %28, %31 : vector<8x8xf32>
    %33 = math.exp %32 : vector<8x8xf32>
    %cst_28 = arith.constant dense<0.000000e+00> : vector<8xf32>
    %34 = vector.multi_reduction <add>, %33, %cst_28 [1] : vector<8x8xf32> to vector<8xf32>
    %35 = vector.shape_cast %34 : vector<8xf32> to vector<8x1xf32>
    %36 = vector.broadcast %35 : vector<8x1xf32> to vector<8x8xf32>
    %37 = arith.divf %33, %36 : vector<8x8xf32>
    %cst_29 = arith.constant dense<0.000000e+00> : vector<8x4xf32>
    %38 = tpu.matmul %37, %27, %cst_29 {dimension_numbers = #tpu.dot_dimension_numbers<[1], [0], [0], [1], [0, 0, 1, 1], [], []>} : vector<8x8xf32>, vector<8x4xf32>, vector<8x4xf32> -> vector<8x4xf32>
    %39 = vector.extract_strided_slice %23 {offsets = [0, 0], sizes = [4, 32], strides = [1, 1]} : vector<32x32xf32> to vector<4x32xf32>
    %cst_30 = arith.constant dense<0.000000e+00> : vector<8x32xf32>
    %40 = tpu.matmul %38, %39, %cst_30 {dimension_numbers = #tpu.dot_dimension_numbers<[1], [0], [0], [1], [0, 0, 1, 1], [], []>} : vector<8x4xf32>, vector<4x32xf32>, vector<8x32xf32> -> vector<8x32xf32>
    %41 = arith.addf %24, %40 : vector<8x32xf32>
    %42 = vector.extract_strided_slice %12 {offsets = [0, 4], sizes = [8, 4], strides = [1, 1]} : vector<8x32xf32> to vector<8x4xf32>
    %43 = vector.extract_strided_slice %17 {offsets = [0, 4], sizes = [8, 4], strides = [1, 1]} : vector<8x32xf32> to vector<8x4xf32>
    %44 = vector.extract_strided_slice %22 {offsets = [0, 4], sizes = [8, 4], strides = [1, 1]} : vector<8x32xf32> to vector<8x4xf32>
    %cst_31 = arith.constant dense<0.000000e+00> : vector<8x8xf32>
    %45 = tpu.matmul %42, %43, %cst_31 {dimension_numbers = #tpu.dot_dimension_numbers<[1], [1], [0], [0], [0, 0, 1, 0], [], []>} : vector<8x4xf32>, vector<8x4xf32>, vector<8x8xf32> -> vector<8x8xf32>
    %cst_32 = arith.constant dense<0xFF800000> : vector<8xf32>
    %46 = vector.multi_reduction <maximumf>, %45, %cst_32 [1] : vector<8x8xf32> to vector<8xf32>
    %47 = vector.shape_cast %46 : vector<8xf32> to vector<8x1xf32>
    %48 = vector.broadcast %47 : vector<8x1xf32> to vector<8x8xf32>
    %49 = arith.subf %45, %48 : vector<8x8xf32>
    %50 = math.exp %49 : vector<8x8xf32>
    %cst_33 = arith.constant dense<0.000000e+00> : vector<8xf32>
    %51 = vector.multi_reduction <add>, %50, %cst_33 [1] : vector<8x8xf32> to vector<8xf32>
    %52 = vector.shape_cast %51 : vector<8xf32> to vector<8x1xf32>
    %53 = vector.broadcast %52 : vector<8x1xf32> to vector<8x8xf32>
    %54 = arith.divf %50, %53 : vector<8x8xf32>
    %cst_34 = arith.constant dense<0.000000e+00> : vector<8x4xf32>
    %55 = tpu.matmul %54, %44, %cst_34 {dimension_numbers = #tpu.dot_dimension_numbers<[1], [0], [0], [1], [0, 0, 1, 1], [], []>} : vector<8x8xf32>, vector<8x4xf32>, vector<8x4xf32> -> vector<8x4xf32>
    %56 = vector.extract_strided_slice %23 {offsets = [4, 0], sizes = [4, 32], strides = [1, 1]} : vector<32x32xf32> to vector<4x32xf32>
    %cst_35 = arith.constant dense<0.000000e+00> : vector<8x32xf32>
    %57 = tpu.matmul %55, %56, %cst_35 {dimension_numbers = #tpu.dot_dimension_numbers<[1], [0], [0], [1], [0, 0, 1, 1], [], []>} : vector<8x4xf32>, vector<4x32xf32>, vector<8x32xf32> -> vector<8x32xf32>
    %58 = arith.addf %41, %57 : vector<8x32xf32>
    %59 = vector.extract_strided_slice %12 {offsets = [0, 8], sizes = [8, 4], strides = [1, 1]} : vector<8x32xf32> to vector<8x4xf32>
    %60 = vector.extract_strided_slice %17 {offsets = [0, 8], sizes = [8, 4], strides = [1, 1]} : vector<8x32xf32> to vector<8x4xf32>
    %61 = vector.extract_strided_slice %22 {offsets = [0, 8], sizes = [8, 4], strides = [1, 1]} : vector<8x32xf32> to vector<8x4xf32>
    %cst_36 = arith.constant dense<0.000000e+00> : vector<8x8xf32>
    %62 = tpu.matmul %59, %60, %cst_36 {dimension_numbers = #tpu.dot_dimension_numbers<[1], [1], [0], [0], [0, 0, 1, 0], [], []>} : vector<8x4xf32>, vector<8x4xf32>, vector<8x8xf32> -> vector<8x8xf32>
    %cst_37 = arith.constant dense<0xFF800000> : vector<8xf32>
    %63 = vector.multi_reduction <maximumf>, %62, %cst_37 [1] : vector<8x8xf32> to vector<8xf32>
    %64 = vector.shape_cast %63 : vector<8xf32> to vector<8x1xf32>
    %65 = vector.broadcast %64 : vector<8x1xf32> to vector<8x8xf32>
    %66 = arith.subf %62, %65 : vector<8x8xf32>
    %67 = math.exp %66 : vector<8x8xf32>
    %cst_38 = arith.constant dense<0.000000e+00> : vector<8xf32>
    %68 = vector.multi_reduction <add>, %67, %cst_38 [1] : vector<8x8xf32> to vector<8xf32>
    %69 = vector.shape_cast %68 : vector<8xf32> to vector<8x1xf32>
    %70 = vector.broadcast %69 : vector<8x1xf32> to vector<8x8xf32>
    %71 = arith.divf %67, %70 : vector<8x8xf32>
    %cst_39 = arith.constant dense<0.000000e+00> : vector<8x4xf32>
    %72 = tpu.matmul %71, %61, %cst_39 {dimension_numbers = #tpu.dot_dimension_numbers<[1], [0], [0], [1], [0, 0, 1, 1], [], []>} : vector<8x8xf32>, vector<8x4xf32>, vector<8x4xf32> -> vector<8x4xf32>
    %73 = vector.extract_strided_slice %23 {offsets = [8, 0], sizes = [4, 32], strides = [1, 1]} : vector<32x32xf32> to vector<4x32xf32>
    %cst_40 = arith.constant dense<0.000000e+00> : vector<8x32xf32>
    %74 = tpu.matmul %72, %73, %cst_40 {dimension_numbers = #tpu.dot_dimension_numbers<[1], [0], [0], [1], [0, 0, 1, 1], [], []>} : vector<8x4xf32>, vector<4x32xf32>, vector<8x32xf32> -> vector<8x32xf32>
    %75 = arith.addf %58, %74 : vector<8x32xf32>
    %76 = vector.extract_strided_slice %12 {offsets = [0, 12], sizes = [8, 4], strides = [1, 1]} : vector<8x32xf32> to vector<8x4xf32>
    %77 = vector.extract_strided_slice %17 {offsets = [0, 12], sizes = [8, 4], strides = [1, 1]} : vector<8x32xf32> to vector<8x4xf32>
    %78 = vector.extract_strided_slice %22 {offsets = [0, 12], sizes = [8, 4], strides = [1, 1]} : vector<8x32xf32> to vector<8x4xf32>
    %cst_41 = arith.constant dense<0.000000e+00> : vector<8x8xf32>
    %79 = tpu.matmul %76, %77, %cst_41 {dimension_numbers = #tpu.dot_dimension_numbers<[1], [1], [0], [0], [0, 0, 1, 0], [], []>} : vector<8x4xf32>, vector<8x4xf32>, vector<8x8xf32> -> vector<8x8xf32>
    %cst_42 = arith.constant dense<0xFF800000> : vector<8xf32>
    %80 = vector.multi_reduction <maximumf>, %79, %cst_42 [1] : vector<8x8xf32> to vector<8xf32>
    %81 = vector.shape_cast %80 : vector<8xf32> to vector<8x1xf32>
    %82 = vector.broadcast %81 : vector<8x1xf32> to vector<8x8xf32>
    %83 = arith.subf %79, %82 : vector<8x8xf32>
    %84 = math.exp %83 : vector<8x8xf32>
    %cst_43 = arith.constant dense<0.000000e+00> : vector<8xf32>
    %85 = vector.multi_reduction <add>, %84, %cst_43 [1] : vector<8x8xf32> to vector<8xf32>
    %86 = vector.shape_cast %85 : vector<8xf32> to vector<8x1xf32>
    %87 = vector.broadcast %86 : vector<8x1xf32> to vector<8x8xf32>
    %88 = arith.divf %84, %87 : vector<8x8xf32>
    %cst_44 = arith.constant dense<0.000000e+00> : vector<8x4xf32>
    %89 = tpu.matmul %88, %78, %cst_44 {dimension_numbers = #tpu.dot_dimension_numbers<[1], [0], [0], [1], [0, 0, 1, 1], [], []>} : vector<8x8xf32>, vector<8x4xf32>, vector<8x4xf32> -> vector<8x4xf32>
    %90 = vector.extract_strided_slice %23 {offsets = [12, 0], sizes = [4, 32], strides = [1, 1]} : vector<32x32xf32> to vector<4x32xf32>
    %cst_45 = arith.constant dense<0.000000e+00> : vector<8x32xf32>
    %91 = tpu.matmul %89, %90, %cst_45 {dimension_numbers = #tpu.dot_dimension_numbers<[1], [0], [0], [1], [0, 0, 1, 1], [], []>} : vector<8x4xf32>, vector<4x32xf32>, vector<8x32xf32> -> vector<8x32xf32>
    %92 = arith.addf %75, %91 : vector<8x32xf32>
    %93 = vector.extract_strided_slice %12 {offsets = [0, 16], sizes = [8, 4], strides = [1, 1]} : vector<8x32xf32> to vector<8x4xf32>
    %94 = vector.extract_strided_slice %17 {offsets = [0, 16], sizes = [8, 4], strides = [1, 1]} : vector<8x32xf32> to vector<8x4xf32>
    %95 = vector.extract_strided_slice %22 {offsets = [0, 16], sizes = [8, 4], strides = [1, 1]} : vector<8x32xf32> to vector<8x4xf32>
    %cst_46 = arith.constant dense<0.000000e+00> : vector<8x8xf32>
    %96 = tpu.matmul %93, %94, %cst_46 {dimension_numbers = #tpu.dot_dimension_numbers<[1], [1], [0], [0], [0, 0, 1, 0], [], []>} : vector<8x4xf32>, vector<8x4xf32>, vector<8x8xf32> -> vector<8x8xf32>
    %cst_47 = arith.constant dense<0xFF800000> : vector<8xf32>
    %97 = vector.multi_reduction <maximumf>, %96, %cst_47 [1] : vector<8x8xf32> to vector<8xf32>
    %98 = vector.shape_cast %97 : vector<8xf32> to vector<8x1xf32>
    %99 = vector.broadcast %98 : vector<8x1xf32> to vector<8x8xf32>
    %100 = arith.subf %96, %99 : vector<8x8xf32>
    %101 = math.exp %100 : vector<8x8xf32>
    %cst_48 = arith.constant dense<0.000000e+00> : vector<8xf32>
    %102 = vector.multi_reduction <add>, %101, %cst_48 [1] : vector<8x8xf32> to vector<8xf32>
    %103 = vector.shape_cast %102 : vector<8xf32> to vector<8x1xf32>
    %104 = vector.broadcast %103 : vector<8x1xf32> to vector<8x8xf32>
    %105 = arith.divf %101, %104 : vector<8x8xf32>
    %cst_49 = arith.constant dense<0.000000e+00> : vector<8x4xf32>
    %106 = tpu.matmul %105, %95, %cst_49 {dimension_numbers = #tpu.dot_dimension_numbers<[1], [0], [0], [1], [0, 0, 1, 1], [], []>} : vector<8x8xf32>, vector<8x4xf32>, vector<8x4xf32> -> vector<8x4xf32>
    %107 = vector.extract_strided_slice %23 {offsets = [16, 0], sizes = [4, 32], strides = [1, 1]} : vector<32x32xf32> to vector<4x32xf32>
    %cst_50 = arith.constant dense<0.000000e+00> : vector<8x32xf32>
    %108 = tpu.matmul %106, %107, %cst_50 {dimension_numbers = #tpu.dot_dimension_numbers<[1], [0], [0], [1], [0, 0, 1, 1], [], []>} : vector<8x4xf32>, vector<4x32xf32>, vector<8x32xf32> -> vector<8x32xf32>
    %109 = arith.addf %92, %108 : vector<8x32xf32>
    %110 = vector.extract_strided_slice %12 {offsets = [0, 20], sizes = [8, 4], strides = [1, 1]} : vector<8x32xf32> to vector<8x4xf32>
    %111 = vector.extract_strided_slice %17 {offsets = [0, 20], sizes = [8, 4], strides = [1, 1]} : vector<8x32xf32> to vector<8x4xf32>
    %112 = vector.extract_strided_slice %22 {offsets = [0, 20], sizes = [8, 4], strides = [1, 1]} : vector<8x32xf32> to vector<8x4xf32>
    %cst_51 = arith.constant dense<0.000000e+00> : vector<8x8xf32>
    %113 = tpu.matmul %110, %111, %cst_51 {dimension_numbers = #tpu.dot_dimension_numbers<[1], [1], [0], [0], [0, 0, 1, 0], [], []>} : vector<8x4xf32>, vector<8x4xf32>, vector<8x8xf32> -> vector<8x8xf32>
    %cst_52 = arith.constant dense<0xFF800000> : vector<8xf32>
    %114 = vector.multi_reduction <maximumf>, %113, %cst_52 [1] : vector<8x8xf32> to vector<8xf32>
    %115 = vector.shape_cast %114 : vector<8xf32> to vector<8x1xf32>
    %116 = vector.broadcast %115 : vector<8x1xf32> to vector<8x8xf32>
    %117 = arith.subf %113, %116 : vector<8x8xf32>
    %118 = math.exp %117 : vector<8x8xf32>
    %cst_53 = arith.constant dense<0.000000e+00> : vector<8xf32>
    %119 = vector.multi_reduction <add>, %118, %cst_53 [1] : vector<8x8xf32> to vector<8xf32>
    %120 = vector.shape_cast %119 : vector<8xf32> to vector<8x1xf32>
    %121 = vector.broadcast %120 : vector<8x1xf32> to vector<8x8xf32>
    %122 = arith.divf %118, %121 : vector<8x8xf32>
    %cst_54 = arith.constant dense<0.000000e+00> : vector<8x4xf32>
    %123 = tpu.matmul %122, %112, %cst_54 {dimension_numbers = #tpu.dot_dimension_numbers<[1], [0], [0], [1], [0, 0, 1, 1], [], []>} : vector<8x8xf32>, vector<8x4xf32>, vector<8x4xf32> -> vector<8x4xf32>
    %124 = vector.extract_strided_slice %23 {offsets = [20, 0], sizes = [4, 32], strides = [1, 1]} : vector<32x32xf32> to vector<4x32xf32>
    %cst_55 = arith.constant dense<0.000000e+00> : vector<8x32xf32>
    %125 = tpu.matmul %123, %124, %cst_55 {dimension_numbers = #tpu.dot_dimension_numbers<[1], [0], [0], [1], [0, 0, 1, 1], [], []>} : vector<8x4xf32>, vector<4x32xf32>, vector<8x32xf32> -> vector<8x32xf32>
    %126 = arith.addf %109, %125 : vector<8x32xf32>
    %127 = vector.extract_strided_slice %12 {offsets = [0, 24], sizes = [8, 4], strides = [1, 1]} : vector<8x32xf32> to vector<8x4xf32>
    %128 = vector.extract_strided_slice %17 {offsets = [0, 24], sizes = [8, 4], strides = [1, 1]} : vector<8x32xf32> to vector<8x4xf32>
    %129 = vector.extract_strided_slice %22 {offsets = [0, 24], sizes = [8, 4], strides = [1, 1]} : vector<8x32xf32> to vector<8x4xf32>
    %cst_56 = arith.constant dense<0.000000e+00> : vector<8x8xf32>
    %130 = tpu.matmul %127, %128, %cst_56 {dimension_numbers = #tpu.dot_dimension_numbers<[1], [1], [0], [0], [0, 0, 1, 0], [], []>} : vector<8x4xf32>, vector<8x4xf32>, vector<8x8xf32> -> vector<8x8xf32>
    %cst_57 = arith.constant dense<0xFF800000> : vector<8xf32>
    %131 = vector.multi_reduction <maximumf>, %130, %cst_57 [1] : vector<8x8xf32> to vector<8xf32>
    %132 = vector.shape_cast %131 : vector<8xf32> to vector<8x1xf32>
    %133 = vector.broadcast %132 : vector<8x1xf32> to vector<8x8xf32>
    %134 = arith.subf %130, %133 : vector<8x8xf32>
    %135 = math.exp %134 : vector<8x8xf32>
    %cst_58 = arith.constant dense<0.000000e+00> : vector<8xf32>
    %136 = vector.multi_reduction <add>, %135, %cst_58 [1] : vector<8x8xf32> to vector<8xf32>
    %137 = vector.shape_cast %136 : vector<8xf32> to vector<8x1xf32>
    %138 = vector.broadcast %137 : vector<8x1xf32> to vector<8x8xf32>
    %139 = arith.divf %135, %138 : vector<8x8xf32>
    %cst_59 = arith.constant dense<0.000000e+00> : vector<8x4xf32>
    %140 = tpu.matmul %139, %129, %cst_59 {dimension_numbers = #tpu.dot_dimension_numbers<[1], [0], [0], [1], [0, 0, 1, 1], [], []>} : vector<8x8xf32>, vector<8x4xf32>, vector<8x4xf32> -> vector<8x4xf32>
    %141 = vector.extract_strided_slice %23 {offsets = [24, 0], sizes = [4, 32], strides = [1, 1]} : vector<32x32xf32> to vector<4x32xf32>
    %cst_60 = arith.constant dense<0.000000e+00> : vector<8x32xf32>
    %142 = tpu.matmul %140, %141, %cst_60 {dimension_numbers = #tpu.dot_dimension_numbers<[1], [0], [0], [1], [0, 0, 1, 1], [], []>} : vector<8x4xf32>, vector<4x32xf32>, vector<8x32xf32> -> vector<8x32xf32>
    %143 = arith.addf %126, %142 : vector<8x32xf32>
    %144 = vector.extract_strided_slice %12 {offsets = [0, 28], sizes = [8, 4], strides = [1, 1]} : vector<8x32xf32> to vector<8x4xf32>
    %145 = vector.extract_strided_slice %17 {offsets = [0, 28], sizes = [8, 4], strides = [1, 1]} : vector<8x32xf32> to vector<8x4xf32>
    %146 = vector.extract_strided_slice %22 {offsets = [0, 28], sizes = [8, 4], strides = [1, 1]} : vector<8x32xf32> to vector<8x4xf32>
    %cst_61 = arith.constant dense<0.000000e+00> : vector<8x8xf32>
    %147 = tpu.matmul %144, %145, %cst_61 {dimension_numbers = #tpu.dot_dimension_numbers<[1], [1], [0], [0], [0, 0, 1, 0], [], []>} : vector<8x4xf32>, vector<8x4xf32>, vector<8x8xf32> -> vector<8x8xf32>
    %cst_62 = arith.constant dense<0xFF800000> : vector<8xf32>
    %148 = vector.multi_reduction <maximumf>, %147, %cst_62 [1] : vector<8x8xf32> to vector<8xf32>
    %149 = vector.shape_cast %148 : vector<8xf32> to vector<8x1xf32>
    %150 = vector.broadcast %149 : vector<8x1xf32> to vector<8x8xf32>
    %151 = arith.subf %147, %150 : vector<8x8xf32>
    %152 = math.exp %151 : vector<8x8xf32>
    %cst_63 = arith.constant dense<0.000000e+00> : vector<8xf32>
    %153 = vector.multi_reduction <add>, %152, %cst_63 [1] : vector<8x8xf32> to vector<8xf32>
    %154 = vector.shape_cast %153 : vector<8xf32> to vector<8x1xf32>
    %155 = vector.broadcast %154 : vector<8x1xf32> to vector<8x8xf32>
    %156 = arith.divf %152, %155 : vector<8x8xf32>
    %cst_64 = arith.constant dense<0.000000e+00> : vector<8x4xf32>
    %157 = tpu.matmul %156, %146, %cst_64 {dimension_numbers = #tpu.dot_dimension_numbers<[1], [0], [0], [1], [0, 0, 1, 1], [], []>} : vector<8x8xf32>, vector<8x4xf32>, vector<8x4xf32> -> vector<8x4xf32>
    %158 = vector.extract_strided_slice %23 {offsets = [28, 0], sizes = [4, 32], strides = [1, 1]} : vector<32x32xf32> to vector<4x32xf32>
    %cst_65 = arith.constant dense<0.000000e+00> : vector<8x32xf32>
    %159 = tpu.matmul %157, %158, %cst_65 {dimension_numbers = #tpu.dot_dimension_numbers<[1], [0], [0], [1], [0, 0, 1, 1], [], []>} : vector<8x4xf32>, vector<4x32xf32>, vector<8x32xf32> -> vector<8x32xf32>
    %160 = arith.addf %143, %159 : vector<8x32xf32>
    %c0_66 = arith.constant 0 : index
    %c0_67 = arith.constant 0 : index
    %161 = vector.load %arg11[%c0_66, %c0_67] : memref<1x32xf32, #tpu.memory_space<vmem>>, vector<1x32xf32>
    %162 = vector.broadcast %161 : vector<1x32xf32> to vector<8x32xf32>
    %163 = arith.addf %160, %162 : vector<8x32xf32>
    %c0_68 = arith.constant 0 : index
    %c0_69 = arith.constant 0 : index
    %c0_70 = arith.constant 0 : index
    %164 = vector.load %arg12[%c0_68, %c0_69, %c0_70] : memref<1x8x32xf32, #tpu.memory_space<vmem>>, vector<1x8x32xf32>
    %165 = vector.shape_cast %164 : vector<1x8x32xf32> to vector<8x32xf32>
    %166 = vector.shape_cast %163 : vector<8x32xf32> to vector<1x8x32xf32>
    tpu.vector_store %arg12[%c0_68, %c0_69, %c0_70], %166 {strides = array<i32>} : memref<1x8x32xf32, #tpu.memory_space<vmem>>, vector<1x8x32xf32>,
    return
  }
  func.func @transform_0(%arg0: i32) -> (i32, i32, i32) {
    %c0_i32 = arith.constant 0 : i32
    %c0_i32_0 = arith.constant 0 : i32
    %c0_i32_1 = arith.constant 0 : i32
    return %arg0, %c0_i32, %c0_i32_0 : i32, i32, i32
  }
  func.func @transform_1(%arg0: i32) -> (i32, i32, i32) {
    %c0_i32 = arith.constant 0 : i32
    %c0_i32_0 = arith.constant 0 : i32
    %c0_i32_1 = arith.constant 0 : i32
    return %arg0, %c0_i32, %c0_i32_0 : i32, i32, i32
  }
  func.func @transform_2(%arg0: i32) -> (i32, i32, i32) {
    %c0_i32 = arith.constant 0 : i32
    %c0_i32_0 = arith.constant 0 : i32
    %c0_i32_1 = arith.constant 0 : i32
    return %arg0, %c0_i32, %c0_i32_0 : i32, i32, i32
  }
  func.func @transform_3(%arg0: i32) -> (i32, i32) {
    %c0_i32 = arith.constant 0 : i32
    %c0_i32_0 = arith.constant 0 : i32
    %c0_i32_1 = arith.constant 0 : i32
    return %c0_i32, %c0_i32_0 : i32, i32
  }
  func.func @transform_4(%arg0: i32) -> (i32, i32) {
    %c0_i32 = arith.constant 0 : i32
    %c0_i32_0 = arith.constant 0 : i32
    %c0_i32_1 = arith.constant 0 : i32
    return %c0_i32, %c0_i32_0 : i32, i32
  }
  func.func @transform_5(%arg0: i32) -> (i32, i32) {
    %c0_i32 = arith.constant 0 : i32
    %c0_i32_0 = arith.constant 0 : i32
    %c0_i32_1 = arith.constant 0 : i32
    return %c0_i32, %c0_i32_0 : i32, i32
  }
  func.func @transform_6(%arg0: i32) -> (i32, i32) {
    %c0_i32 = arith.constant 0 : i32
    %c0_i32_0 = arith.constant 0 : i32
    %c0_i32_1 = arith.constant 0 : i32
    return %c0_i32, %c0_i32_0 : i32, i32
  }
  func.func @transform_7(%arg0: i32) -> (i32, i32) {
    %c0_i32 = arith.constant 0 : i32
    %c0_i32_0 = arith.constant 0 : i32
    %c0_i32_1 = arith.constant 0 : i32
    return %c0_i32, %c0_i32_0 : i32, i32
  }
  func.func @transform_8(%arg0: i32) -> (i32, i32) {
    %c0_i32 = arith.constant 0 : i32
    %c0_i32_0 = arith.constant 0 : i32
    %c0_i32_1 = arith.constant 0 : i32
    return %c0_i32, %c0_i32_0 : i32, i32
  }
  func.func @transform_9(%arg0: i32) -> (i32, i32) {
    %c0_i32 = arith.constant 0 : i32
    %c0_i32_0 = arith.constant 0 : i32
    %c0_i32_1 = arith.constant 0 : i32
    return %c0_i32, %c0_i32_0 : i32, i32
  }
  func.func @transform_10(%arg0: i32) -> (i32, i32) {
    %c0_i32 = arith.constant 0 : i32
    %c0_i32_0 = arith.constant 0 : i32
    %c0_i32_1 = arith.constant 0 : i32
    return %c0_i32, %c0_i32_0 : i32, i32
  }
  func.func @transform_11(%arg0: i32) -> (i32, i32, i32) {
    %c0_i32 = arith.constant 0 : i32
    %c0_i32_0 = arith.constant 0 : i32
    %c0_i32_1 = arith.constant 0 : i32
    return %arg0, %c0_i32, %c0_i32_0 : i32, i32, i32
  }
}

</mosaic_0001>

<llo_original>
// kernel: tpu_custom_call.1
$region0: #{tpu_custom_call.1}
  #allocation0 [shape = 'u32[]', space=smem, size = 0x4, offset = 0x4, fixed_abs, tag = 'smem constant byte address 0x4 - core index']
  #allocation1 [shape = 'u32[72,128]{1,0:T(1,128)}', space=vmem, size = 0x9000, scoped, tag = 'internal scratch']
  %s0 = inlined_call_operand.hbm [shape: f32[2,8,32], index: 0, kind: input, shape index: {}]
  %s1 = inlined_call_operand.hbm [shape: f32[2,8,32], index: 1, kind: input, shape index: {}]
  %s2 = inlined_call_operand.hbm [shape: f32[2,8,32], index: 2, kind: input, shape index: {}]
  %s3 = inlined_call_operand.hbm [shape: f32[32,32], index: 3, kind: input, shape index: {}]
  %s4 = inlined_call_operand.hbm [shape: f32[32,32], index: 4, kind: input, shape index: {}]
  %s5 = inlined_call_operand.hbm [shape: f32[32,32], index: 5, kind: input, shape index: {}]
  %s6 = inlined_call_operand.hbm [shape: f32[32,32], index: 6, kind: input, shape index: {}]
  %s7 = inlined_call_operand.vmem [shape: f32[1,32], index: 7, kind: input, shape index: {}]
  %s8 = inlined_call_operand.vmem [shape: f32[1,32], index: 8, kind: input, shape index: {}]
  %s9 = inlined_call_operand.vmem [shape: f32[1,32], index: 9, kind: input, shape index: {}]
  %s10 = inlined_call_operand.vmem [shape: f32[1,32], index: 10, kind: input, shape index: {}]
  %s11 = inlined_call_operand.hbm [shape: f32[2,8,32], index: 11, kind: output, shape index: {}]
  %s12 = sld [smem:[#allocation0]]
  $region105: #{tpu_custom_call.1} parent=0
    _
  %s14 = ssub.s32 1, %s12
  %s15 = scalar_select 0, %s14, %s12
  $region1: #{tpu_custom_call.1} parent=0
    #allocation2 [shape = 'u8[8192]{0}', space=vmem, size = 0x2000, scoped, tag = 'input window, operand 0']
    #allocation3 [shape = 's32[2]{0}', space=sflag, size = 0x8, scoped, tag = 'scoped memory for tpu_custom_call.1']
    #allocation4 [shape = 's32[2]{0}', space=sflag, size = 0x8, scoped, tag = 'scoped memory for tpu_custom_call.1']
    #allocation5 [shape = 'u8[8192]{0}', space=vmem, size = 0x2000, scoped, tag = 'input window, operand 1']
    #allocation6 [shape = 's32[2]{0}', space=sflag, size = 0x8, scoped, tag = 'scoped memory for tpu_custom_call.1']
    #allocation7 [shape = 'u8[8192]{0}', space=vmem, size = 0x2000, scoped, tag = 'input window, operand 2']
    #allocation8 [shape = 'u8[16384]{0}', space=vmem, size = 0x4000, scoped, tag = 'input window, operand 3, single buffered']
    #allocation9 [shape = 's32[1]{0}', space=sflag, size = 0x4, scoped, tag = 'scoped memory for tpu_custom_call.1']
    #allocation10 [shape = 'u8[16384]{0}', space=vmem, size = 0x4000, scoped, tag = 'input window, operand 4, single buffered']
    #allocation11 [shape = 'u8[16384]{0}', space=vmem, size = 0x4000, scoped, tag = 'input window, operand 5, single buffered']
    #allocation12 [shape = 's32[1]{0}', space=sflag, size = 0x4, scoped, tag = 'scoped memory for tpu_custom_call.1']
    #allocation13 [shape = 'u8[16384]{0}', space=vmem, size = 0x4000, scoped, tag = 'input window, operand 6, single buffered']
    #allocation14 [shape = 'u8[8192]{0}', space=vmem, size = 0x2000, scoped, tag = 'output window, operand 0']
    %16 = vsyncpa [#allocation3], 0
    %s17 = scalar_lea.sflag [#allocation3], 1
    %18 = vsyncpa %s17, 0
    %19 = vsyncpa [#allocation6], 0
    %s20 = scalar_lea.sflag [#allocation6], 1
    %21 = vsyncpa %s20, 0
    %22 = vsyncpa [#allocation9], 0
    %23 = vsyncpa [#allocation12], 0
    %24 = vsyncpa [#allocation4], 0
    %s25 = scalar_lea.sflag [#allocation4], 1
    %26 = vsyncpa %s25, 0
    loop: start=0, step=1, limit=4
    $region2: #{tpu_custom_call.1} parent=1 // loop_pre_header
      _
    $region3: #{tpu_custom_call.1} parent=1 // loop_header
      %s28 = sphi 0, %s32
      %p29 = scmp.ge.s32.totalorder %s28, 4
      %s38 = sphi 0, %s40
      %s41 = sphi 0, %s38
      %s42 = sphi 0, %s41
      %s58 = sphi 0, %s42
      %s64 = sphi 0, %s66
      %s67 = sphi 0, %s64
      %s68 = sphi 0, %s67
      %s84 = sphi 0, %s68
      %s90 = sphi 0, %s92
      %s93 = sphi 0, %s90
      %s94 = sphi 0, %s93
      %s110 = sphi 0, %s94
      %s114 = sphi 0, %s114
      %s116 = sphi 0, %s114
      %s117 = sphi 0, %s116
      %s131 = sphi 0, %s117
      %s135 = sphi 0, %s135
      %s137 = sphi 0, %s135
      %s138 = sphi 0, %s137
      %s152 = sphi 0, %s138
      %s156 = sphi 0, %s156
      %s158 = sphi 0, %s156
      %s159 = sphi 0, %s158
      %s173 = sphi 0, %s159
      %s177 = sphi 0, %s177
      %s179 = sphi 0, %s177
      %s180 = sphi 0, %s179
      %s194 = sphi 0, %s180
      %s198 = sphi 0, %s198
      %s200 = sphi 0, %s198
      %s201 = sphi 0, %s200
      %s215 = sphi 0, %s201
      %s219 = sphi 0, %s219
      %s221 = sphi 0, %s219
      %s222 = sphi 0, %s221
      %s236 = sphi 0, %s222
      %s240 = sphi 0, %s240
      %s242 = sphi 0, %s240
      %s243 = sphi 0, %s242
      %s257 = sphi 0, %s243
      %s261 = sphi 0, %s261
      %s263 = sphi 0, %s261
      %s264 = sphi 0, %s263
      %s278 = sphi 0, %s264
      %s284 = sphi 0, %s286
      %s287 = sphi 0, %s284
      %s288 = sphi 0, %s287
      %s304 = sphi 0, %s288
    $region4: #{tpu_custom_call.1} parent=1 // loop_header_branch
      %31 = sbr.rel (%p29) target = $region8
    $region5: #{tpu_custom_call.1} parent=1 // loop_body
      %s33 = ssub.s32 %s28, 1
      %s34 = ssub.s32 %s28, 2
      %s35 = sadd.s32 %s28, 1
      %s36 = ssub.s32 %s28, %s35
      %p37 = scmp.eq.s32.totalorder %s36, 0
      %s39 = sadd.s32 %s38, 1
      %s40 = scalar_select %p37, %s38, %s39
      %p43 = pneg %p37
      %p44 = scmp.eq.s32.totalorder %s28, 1
      %p45 = por %p43, %p44
      %p46 = scmp.ne.s32.totalorder %s38, %s41
      %p47 = scmp.eq.s32.totalorder %s28, 0
      %p48 = por %p46, %p47
      %p49 = scmp.ne.s32.totalorder %s38, %s41
      %p50 = scmp.eq.s32.totalorder %s33, 1
      %p51 = por %p49, %p50
      %p52 = scmp.ne.s32.totalorder %s41, %s42
      %p53 = scmp.eq.s32.totalorder %s33, 0
      %p54 = por %p52, %p53
      %p55 = scmp.ne.s32.totalorder %s41, %s42
      %p56 = scmp.eq.s32.totalorder %s34, 1
      %p57 = por %p55, %p56
      %p59 = scmp.ne.s32.totalorder %s42, %s58
      %p60 = scmp.eq.s32.totalorder %s34, 0
      %p61 = por %p59, %p60
      %s62 = ssub.s32 %s28, %s35
      %p63 = scmp.eq.s32.totalorder %s62, 0
      %s65 = sadd.s32 %s64, 1
      %s66 = scalar_select %p63, %s64, %s65
      %p69 = pneg %p63
      %p70 = scmp.eq.s32.totalorder %s28, 1
      %p71 = por %p69, %p70
      %p72 = scmp.ne.s32.totalorder %s64, %s67
      %p73 = scmp.eq.s32.totalorder %s28, 0
      %p74 = por %p72, %p73
      %p75 = scmp.ne.s32.totalorder %s64, %s67
      %p76 = scmp.eq.s32.totalorder %s33, 1
      %p77 = por %p75, %p76
      %p78 = scmp.ne.s32.totalorder %s67, %s68
      %p79 = scmp.eq.s32.totalorder %s33, 0
      %p80 = por %p78, %p79
      %p81 = scmp.ne.s32.totalorder %s67, %s68
      %p82 = scmp.eq.s32.totalorder %s34, 1
      %p83 = por %p81, %p82
      %p85 = scmp.ne.s32.totalorder %s68, %s84
      %p86 = scmp.eq.s32.totalorder %s34, 0
      %p87 = por %p85, %p86
      %s88 = ssub.s32 %s28, %s35
      %p89 = scmp.eq.s32.totalorder %s88, 0
      %s91 = sadd.s32 %s90, 1
      %s92 = scalar_select %p89, %s90, %s91
      %p95 = pneg %p89
      %p96 = scmp.eq.s32.totalorder %s28, 1
      %p97 = por %p95, %p96
      %p98 = scmp.ne.s32.totalorder %s90, %s93
      %p99 = scmp.eq.s32.totalorder %s28, 0
      %p100 = por %p98, %p99
      %p101 = scmp.ne.s32.totalorder %s90, %s93
      %p102 = scmp.eq.s32.totalorder %s33, 1
      %p103 = por %p101, %p102
      %p104 = scmp.ne.s32.totalorder %s93, %s94
      %p105 = scmp.eq.s32.totalorder %s33, 0
      %p106 = por %p104, %p105
      %p107 = scmp.ne.s32.totalorder %s93, %s94
      %p108 = scmp.eq.s32.totalorder %s34, 1
      %p109 = por %p107, %p108
      %p111 = scmp.ne.s32.totalorder %s94, %s110
      %p112 = scmp.eq.s32.totalorder %s34, 0
      %p113 = por %p111, %p112
      %s115 = sadd.s32 %s114, 1
      %p118 = scmp.eq.s32.totalorder %s28, 1
      %p119 = scmp.ne.s32.totalorder %s114, %s116
      %p120 = scmp.eq.s32.totalorder %s28, 0
      %p121 = por %p119, %p120
      %p122 = scmp.ne.s32.totalorder %s114, %s116
      %p123 = scmp.eq.s32.totalorder %s33, 1
      %p124 = por %p122, %p123
      %p125 = scmp.ne.s32.totalorder %s116, %s117
      %p126 = scmp.eq.s32.totalorder %s33, 0
      %p127 = por %p125, %p126
      %p128 = scmp.ne.s32.totalorder %s116, %s117
      %p129 = scmp.eq.s32.totalorder %s34, 1
      %p130 = por %p128, %p129
      %p132 = scmp.ne.s32.totalorder %s117, %s131
      %p133 = scmp.eq.s32.totalorder %s34, 0
      %p134 = por %p132, %p133
      %s136 = sadd.s32 %s135, 1
      %p139 = scmp.eq.s32.totalorder %s28, 1
      %p140 = scmp.ne.s32.totalorder %s135, %s137
      %p141 = scmp.eq.s32.totalorder %s28, 0
      %p142 = por %p140, %p141
      %p143 = scmp.ne.s32.totalorder %s135, %s137
      %p144 = scmp.eq.s32.totalorder %s33, 1
      %p145 = por %p143, %p144
      %p146 = scmp.ne.s32.totalorder %s137, %s138
      %p147 = scmp.eq.s32.totalorder %s33, 0
      %p148 = por %p146, %p147
      %p149 = scmp.ne.s32.totalorder %s137, %s138
      %p150 = scmp.eq.s32.totalorder %s34, 1
      %p151 = por %p149, %p150
      %p153 = scmp.ne.s32.totalorder %s138, %s152
      %p154 = scmp.eq.s32.totalorder %s34, 0
      %p155 = por %p153, %p154
      %s157 = sadd.s32 %s156, 1
      %p160 = scmp.eq.s32.totalorder %s28, 1
      %p161 = scmp.ne.s32.totalorder %s156, %s158
      %p162 = scmp.eq.s32.totalorder %s28, 0
      %p163 = por %p161, %p162
      %p164 = scmp.ne.s32.totalorder %s156, %s158
      %p165 = scmp.eq.s32.totalorder %s33, 1
      %p166 = por %p164, %p165
      %p167 = scmp.ne.s32.totalorder %s158, %s159
      %p168 = scmp.eq.s32.totalorder %s33, 0
      %p169 = por %p167, %p168
      %p170 = scmp.ne.s32.totalorder %s158, %s159
      %p171 = scmp.eq.s32.totalorder %s34, 1
      %p172 = por %p170, %p171
      %p174 = scmp.ne.s32.totalorder %s159, %s173
      %p175 = scmp.eq.s32.totalorder %s34, 0
      %p176 = por %p174, %p175
      %s178 = sadd.s32 %s177, 1
      %p181 = scmp.eq.s32.totalorder %s28, 1
      %p182 = scmp.ne.s32.totalorder %s177, %s179
      %p183 = scmp.eq.s32.totalorder %s28, 0
      %p184 = por %p182, %p183
      %p185 = scmp.ne.s32.totalorder %s177, %s179
      %p186 = scmp.eq.s32.totalorder %s33, 1
      %p187 = por %p185, %p186
      %p188 = scmp.ne.s32.totalorder %s179, %s180
      %p189 = scmp.eq.s32.totalorder %s33, 0
      %p190 = por %p188, %p189
      %p191 = scmp.ne.s32.totalorder %s179, %s180
      %p192 = scmp.eq.s32.totalorder %s34, 1
      %p193 = por %p191, %p192
      %p195 = scmp.ne.s32.totalorder %s180, %s194
      %p196 = scmp.eq.s32.totalorder %s34, 0
      %p197 = por %p195, %p196
      %s199 = sadd.s32 %s198, 1
      %p202 = scmp.eq.s32.totalorder %s28, 1
      %p203 = scmp.ne.s32.totalorder %s198, %s200
      %p204 = scmp.eq.s32.totalorder %s28, 0
      %p205 = por %p203, %p204
      %p206 = scmp.ne.s32.totalorder %s198, %s200
      %p207 = scmp.eq.s32.totalorder %s33, 1
      %p208 = por %p206, %p207
      %p209 = scmp.ne.s32.totalorder %s200, %s201
      %p210 = scmp.eq.s32.totalorder %s33, 0
      %p211 = por %p209, %p210
      %p212 = scmp.ne.s32.totalorder %s200, %s201
      %p213 = scmp.eq.s32.totalorder %s34, 1
      %p214 = por %p212, %p213
      %p216 = scmp.ne.s32.totalorder %s201, %s215
      %p217 = scmp.eq.s32.totalorder %s34, 0
      %p218 = por %p216, %p217
      %s220 = sadd.s32 %s219, 1
      %p223 = scmp.eq.s32.totalorder %s28, 1
      %p224 = scmp.ne.s32.totalorder %s219, %s221
      %p225 = scmp.eq.s32.totalorder %s28, 0
      %p226 = por %p224, %p225
      %p227 = scmp.ne.s32.totalorder %s219, %s221
      %p228 = scmp.eq.s32.totalorder %s33, 1
      %p229 = por %p227, %p228
      %p230 = scmp.ne.s32.totalorder %s221, %s222
      %p231 = scmp.eq.s32.totalorder %s33, 0
      %p232 = por %p230, %p231
      %p233 = scmp.ne.s32.totalorder %s221, %s222
      %p234 = scmp.eq.s32.totalorder %s34, 1
      %p235 = por %p233, %p234
      %p237 = scmp.ne.s32.totalorder %s222, %s236
      %p238 = scmp.eq.s32.totalorder %s34, 0
      %p239 = por %p237, %p238
      %s241 = sadd.s32 %s240, 1
      %p244 = scmp.eq.s32.totalorder %s28, 1
      %p245 = scmp.ne.s32.totalorder %s240, %s242
      %p246 = scmp.eq.s32.totalorder %s28, 0
      %p247 = por %p245, %p246
      %p248 = scmp.ne.s32.totalorder %s240, %s242
      %p249 = scmp.eq.s32.totalorder %s33, 1
      %p250 = por %p248, %p249
      %p251 = scmp.ne.s32.totalorder %s242, %s243
      %p252 = scmp.eq.s32.totalorder %s33, 0
      %p253 = por %p251, %p252
      %p254 = scmp.ne.s32.totalorder %s242, %s243
      %p255 = scmp.eq.s32.totalorder %s34, 1
      %p256 = por %p254, %p255
      %p258 = scmp.ne.s32.totalorder %s243, %s257
      %p259 = scmp.eq.s32.totalorder %s34, 0
      %p260 = por %p258, %p259
      %s262 = sadd.s32 %s261, 1
      %p265 = scmp.eq.s32.totalorder %s28, 1
      %p266 = scmp.ne.s32.totalorder %s261, %s263
      %p267 = scmp.eq.s32.totalorder %s28, 0
      %p268 = por %p266, %p267
      %p269 = scmp.ne.s32.totalorder %s261, %s263
      %p270 = scmp.eq.s32.totalorder %s33, 1
      %p271 = por %p269, %p270
      %p272 = scmp.ne.s32.totalorder %s263, %s264
      %p273 = scmp.eq.s32.totalorder %s33, 0
      %p274 = por %p272, %p273
      %p275 = scmp.ne.s32.totalorder %s263, %s264
      %p276 = scmp.eq.s32.totalorder %s34, 1
      %p277 = por %p275, %p276
      %p279 = scmp.ne.s32.totalorder %s264, %s278
      %p280 = scmp.eq.s32.totalorder %s34, 0
      %p281 = por %p279, %p280
      %s282 = ssub.s32 %s28, %s35
      %p283 = scmp.eq.s32.totalorder %s282, 0
      %s285 = sadd.s32 %s284, 1
      %s286 = scalar_select %p283, %s284, %s285
      %p289 = pneg %p283
      %p290 = scmp.eq.s32.totalorder %s28, 1
      %p291 = por %p289, %p290
      %p292 = scmp.ne.s32.totalorder %s284, %s287
      %p293 = scmp.eq.s32.totalorder %s28, 0
      %p294 = por %p292, %p293
      %p295 = scmp.ne.s32.totalorder %s284, %s287
      %p296 = scmp.eq.s32.totalorder %s33, 1
      %p297 = por %p295, %p296
      %p298 = scmp.ne.s32.totalorder %s287, %s288
      %p299 = scmp.eq.s32.totalorder %s33, 0
      %p300 = por %p298, %p299
      %p301 = scmp.ne.s32.totalorder %s287, %s288
      %p302 = scmp.eq.s32.totalorder %s34, 1
      %p303 = por %p301, %p302
      %p305 = scmp.ne.s32.totalorder %s288, %s304
      %p306 = scmp.eq.s32.totalorder %s34, 0
      %p307 = por %p305, %p306
      %p308 = scmp.le.s32.totalorder 1, %s28
      %p309 = scmp.lt.s32.totalorder %s28, 3
      %p310 = pnand %p308, %p309
      %p311 = pneg %p310
      // Predicated region
      $region9: #{tpu_custom_call.1} parent=5 // pred_check
        _
      $region10: #{tpu_custom_call.1} parent=5 // pred_check_branch
        %313 = sbr.rel (%p310) target = $region12
      $region11: #{tpu_custom_call.1} parent=5 // pred_region
        %s314 = ssub.s32 %s28, 1
        // Predicated region
        $region13: #{tpu_custom_call.1} parent=11 // pred_check
          %p315 = pneg %p127
        $region14: #{tpu_custom_call.1} parent=11 // pred_check_branch
          %317 = sbr.rel (%p315) target = $region16
        $region15: #{tpu_custom_call.1} parent=11 // pred_region
          %319 = vsyncadd [#allocation9], 0
          %s320 = sshll.u32 %s3, 4
          %s321 = int_to_ptr.hbm [resolvable:$true] %s320
          %s322 = sshll.u32 [#allocation8], 4
          %s323 = int_to_ptr.vmem [resolvable:$true] %s322
          %328 = dma.hbm_to_vmem [thread:$0]  %s321, 512, %s323, [#allocation9], 128, 128, 8
        $region16: #{tpu_custom_call.1} parent=11 // pred_fallthru
          _
        // Predicated region
        $region17: #{tpu_custom_call.1} parent=11 // pred_check
          %p329 = pneg %p148
        $region18: #{tpu_custom_call.1} parent=11 // pred_check_branch
          %331 = sbr.rel (%p329) target = $region20
        $region19: #{tpu_custom_call.1} parent=11 // pred_region
          %333 = vsyncadd [#allocation9], 0
          %s334 = sshll.u32 %s4, 4
          %s335 = int_to_ptr.hbm [resolvable:$true] %s334
          %s336 = sshll.u32 [#allocation10], 4
          %s337 = int_to_ptr.vmem [resolvable:$true] %s336
          %342 = dma.hbm_to_vmem [thread:$0]  %s335, 512, %s337, [#allocation9], 128, 128, 8
        $region20: #{tpu_custom_call.1} parent=11 // pred_fallthru
          _
        // Predicated region
        $region21: #{tpu_custom_call.1} parent=11 // pred_check
          %p343 = pneg %p169
        $region22: #{tpu_custom_call.1} parent=11 // pred_check_branch
          %345 = sbr.rel (%p343) target = $region24
        $region23: #{tpu_custom_call.1} parent=11 // pred_region
          %347 = vsyncadd [#allocation12], 0
          %s348 = sshll.u32 %s5, 4
          %s349 = int_to_ptr.hbm [resolvable:$true] %s348
          %s350 = sshll.u32 [#allocation11], 4
          %s351 = int_to_ptr.vmem [resolvable:$true] %s350
          %356 = dma.hbm_to_vmem [thread:$0]  %s349, 512, %s351, [#allocation12], 128, 128, 8
        $region24: #{tpu_custom_call.1} parent=11 // pred_fallthru
          _
        // Predicated region
        $region25: #{tpu_custom_call.1} parent=11 // pred_check
          %p357 = pneg %p190
        $region26: #{tpu_custom_call.1} parent=11 // pred_check_branch
          %359 = sbr.rel (%p357) target = $region28
        $region27: #{tpu_custom_call.1} parent=11 // pred_region
          %361 = vsyncadd [#allocation12], 0
          %s362 = sshll.u32 %s6, 4
          %s363 = int_to_ptr.hbm [resolvable:$true] %s362
          %s364 = sshll.u32 [#allocation13], 4
          %s365 = int_to_ptr.vmem [resolvable:$true] %s364
          %370 = dma.hbm_to_vmem [thread:$0]  %s363, 512, %s365, [#allocation12], 128, 128, 8
        $region28: #{tpu_custom_call.1} parent=11 // pred_fallthru
          _
        // Predicated region
        $region29: #{tpu_custom_call.1} parent=11 // pred_check
          %p371 = pneg %p211
        $region30: #{tpu_custom_call.1} parent=11 // pred_check_branch
          %373 = sbr.rel (%p371) target = $region32
        $region31: #{tpu_custom_call.1} parent=11 // pred_region
          _
        $region32: #{tpu_custom_call.1} parent=11 // pred_fallthru
          _
        // Predicated region
        $region33: #{tpu_custom_call.1} parent=11 // pred_check
          %p374 = pneg %p232
        $region34: #{tpu_custom_call.1} parent=11 // pred_check_branch
          %376 = sbr.rel (%p374) target = $region36
        $region35: #{tpu_custom_call.1} parent=11 // pred_region
          _
        $region36: #{tpu_custom_call.1} parent=11 // pred_fallthru
          _
        // Predicated region
        $region37: #{tpu_custom_call.1} parent=11 // pred_check
          %p377 = pneg %p253
        $region38: #{tpu_custom_call.1} parent=11 // pred_check_branch
          %379 = sbr.rel (%p377) target = $region40
        $region39: #{tpu_custom_call.1} parent=11 // pred_region
          _
        $region40: #{tpu_custom_call.1} parent=11 // pred_fallthru
          _
        // Predicated region
        $region41: #{tpu_custom_call.1} parent=11 // pred_check
          %p380 = pneg %p274
        $region42: #{tpu_custom_call.1} parent=11 // pred_check_branch
          %382 = sbr.rel (%p380) target = $region44
        $region43: #{tpu_custom_call.1} parent=11 // pred_region
          _
        $region44: #{tpu_custom_call.1} parent=11 // pred_fallthru
          _
      $region12: #{tpu_custom_call.1} parent=5 // pred_fallthru
        _
      %p383 = scmp.lt.s32.totalorder %s28, 2
      // Predicated region
      $region45: #{tpu_custom_call.1} parent=5 // pred_check
        %p384 = pneg %p383
      $region46: #{tpu_custom_call.1} parent=5 // pred_check_branch
        %386 = sbr.rel (%p384) target = $region48
      $region47: #{tpu_custom_call.1} parent=5 // pred_region
        // Predicated region
        $region49: #{tpu_custom_call.1} parent=47 // pred_check
          %p387 = pneg %p48
        $region50: #{tpu_custom_call.1} parent=47 // pred_check_branch
          %389 = sbr.rel (%p387) target = $region52
        $region51: #{tpu_custom_call.1} parent=47 // pred_region
          %s390 = sand.u32 %s38, 1
          %s391 = scalar_lea.sflag [#allocation3], %s390
          %s392 = sand.u32 %s38, 1
          %s393 = smul.addr %s392, 8
          %s394 = scalar_lea.vmem [#allocation2], %s393
          %396 = vsyncadd %s391, 0
          %s397 = smul.addr %s28, 8
          %s398 = scalar_lea.hbm %s0, %s397
          %s400 = sshll.u32 %s398, 4
          %s401 = int_to_ptr.hbm [resolvable:$true] %s400
          %s402 = sshll.u32 %s394, 4
          %s403 = int_to_ptr.vmem [resolvable:$true] %s402
          %405 = dma.hbm_to_vmem [thread:$0]  %s401, 128, %s403, %s391
        $region52: #{tpu_custom_call.1} parent=47 // pred_fallthru
          _
        // Predicated region
        $region53: #{tpu_custom_call.1} parent=47 // pred_check
          %p406 = pneg %p74
        $region54: #{tpu_custom_call.1} parent=47 // pred_check_branch
          %408 = sbr.rel (%p406) target = $region56
        $region55: #{tpu_custom_call.1} parent=47 // pred_region
          %s409 = sand.u32 %s28, 1
          %s410 = scalar_lea.sflag [#allocation6], %s409
          %s411 = sand.u32 %s64, 1
          %s412 = smul.addr %s411, 8
          %s413 = scalar_lea.vmem [#allocation5], %s412
          %415 = vsyncadd %s410, 0
          %s416 = smul.addr %s28, 8
          %s417 = scalar_lea.hbm %s1, %s416
          %s419 = sshll.u32 %s417, 4
          %s420 = int_to_ptr.hbm [resolvable:$true] %s419
          %s421 = sshll.u32 %s413, 4
          %s422 = int_to_ptr.vmem [resolvable:$true] %s421
          %424 = dma.hbm_to_vmem [thread:$0]  %s420, 128, %s422, %s410
        $region56: #{tpu_custom_call.1} parent=47 // pred_fallthru
          _
        // Predicated region
        $region57: #{tpu_custom_call.1} parent=47 // pred_check
          %p425 = pneg %p100
        $region58: #{tpu_custom_call.1} parent=47 // pred_check_branch
          %427 = sbr.rel (%p425) target = $region60
        $region59: #{tpu_custom_call.1} parent=47 // pred_region
          %s428 = sand.u32 %s28, 1
          %s429 = scalar_lea.sflag [#allocation6], %s428
          %s430 = sand.u32 %s90, 1
          %s431 = smul.addr %s430, 8
          %s432 = scalar_lea.vmem [#allocation7], %s431
          %434 = vsyncadd %s429, 0
          %s435 = smul.addr %s28, 8
          %s436 = scalar_lea.hbm %s2, %s435
          %s438 = sshll.u32 %s436, 4
          %s439 = int_to_ptr.hbm [resolvable:$true] %s438
          %s440 = sshll.u32 %s432, 4
          %s441 = int_to_ptr.vmem [resolvable:$true] %s440
          %443 = dma.hbm_to_vmem [thread:$0]  %s439, 128, %s441, %s429
        $region60: #{tpu_custom_call.1} parent=47 // pred_fallthru
          _
      $region48: #{tpu_custom_call.1} parent=5 // pred_fallthru
        _
      %p444 = scmp.le.s32.totalorder 1, %s28
      %p445 = scmp.lt.s32.totalorder %s28, 3
      %p446 = pnand %p444, %p445
      %p447 = pneg %p446
      // Predicated region
      $region61: #{tpu_custom_call.1} parent=5 // pred_check
        _
      $region62: #{tpu_custom_call.1} parent=5 // pred_check_branch
        %449 = sbr.rel (%p446) target = $region64
      $region63: #{tpu_custom_call.1} parent=5 // pred_region
        %s450 = ssub.s32 %s28, 1
        %s451 = sand.u32 %s41, 1
        %s452 = scalar_lea.sflag [#allocation3], %s451
        %s453 = sand.u32 %s41, 1
        %s454 = smul.addr %s453, 8
        %s455 = scalar_lea.vmem [#allocation2], %s454
        // Predicated region
        $region65: #{tpu_custom_call.1} parent=63 // pred_check
          %p456 = pneg %p54
        $region66: #{tpu_custom_call.1} parent=63 // pred_check_branch
          %458 = sbr.rel (%p456) target = $region68
        $region67: #{tpu_custom_call.1} parent=63 // pred_region
          %460 = dma.done %s452, 128
        $region68: #{tpu_custom_call.1} parent=63 // pred_fallthru
          _
        %s461 = sand.u32 %s33, 1
        %s462 = scalar_lea.sflag [#allocation6], %s461
        %s463 = sand.u32 %s67, 1
        %s464 = smul.addr %s463, 8
        %s465 = scalar_lea.vmem [#allocation5], %s464
        // Predicated region
        $region69: #{tpu_custom_call.1} parent=63 // pred_check
          %p466 = pneg %p80
        $region70: #{tpu_custom_call.1} parent=63 // pred_check_branch
          %468 = sbr.rel (%p466) target = $region72
        $region71: #{tpu_custom_call.1} parent=63 // pred_region
          %470 = dma.done %s462, 128
        $region72: #{tpu_custom_call.1} parent=63 // pred_fallthru
          _
        %s471 = sand.u32 %s33, 1
        %s472 = scalar_lea.sflag [#allocation6], %s471
        %s473 = sand.u32 %s93, 1
        %s474 = smul.addr %s473, 8
        %s475 = scalar_lea.vmem [#allocation7], %s474
        // Predicated region
        $region73: #{tpu_custom_call.1} parent=63 // pred_check
          %p476 = pneg %p106
        $region74: #{tpu_custom_call.1} parent=63 // pred_check_branch
          %478 = sbr.rel (%p476) target = $region76
        $region75: #{tpu_custom_call.1} parent=63 // pred_region
          %480 = dma.done %s472, 128
        $region76: #{tpu_custom_call.1} parent=63 // pred_fallthru
          _
        // Predicated region
        $region77: #{tpu_custom_call.1} parent=63 // pred_check
          %p481 = pneg %p127
        $region78: #{tpu_custom_call.1} parent=63 // pred_check_branch
          %483 = sbr.rel (%p481) target = $region80
        $region79: #{tpu_custom_call.1} parent=63 // pred_region
          %485 = dma.done [#allocation9], 512
        $region80: #{tpu_custom_call.1} parent=63 // pred_fallthru
          _
        // Predicated region
        $region81: #{tpu_custom_call.1} parent=63 // pred_check
          %p486 = pneg %p148
        $region82: #{tpu_custom_call.1} parent=63 // pred_check_branch
          %488 = sbr.rel (%p486) target = $region84
        $region83: #{tpu_custom_call.1} parent=63 // pred_region
          %490 = dma.done [#allocation9], 512
        $region84: #{tpu_custom_call.1} parent=63 // pred_fallthru
          _
        // Predicated region
        $region85: #{tpu_custom_call.1} parent=63 // pred_check
          %p491 = pneg %p169
        $region86: #{tpu_custom_call.1} parent=63 // pred_check_branch
          %493 = sbr.rel (%p491) target = $region88
        $region87: #{tpu_custom_call.1} parent=63 // pred_region
          %495 = dma.done [#allocation12], 512
        $region88: #{tpu_custom_call.1} parent=63 // pred_fallthru
          _
        // Predicated region
        $region89: #{tpu_custom_call.1} parent=63 // pred_check
          %p496 = pneg %p190
        $region90: #{tpu_custom_call.1} parent=63 // pred_check_branch
          %498 = sbr.rel (%p496) target = $region92
        $region91: #{tpu_custom_call.1} parent=63 // pred_region
          %500 = dma.done [#allocation12], 512
        $region92: #{tpu_custom_call.1} parent=63 // pred_fallthru
          _
        %s501 = sand.u32 %s41, 1
        %s502 = scalar_lea.sflag [#allocation3], %s501
        %s503 = sand.u32 %s41, 1
        %s504 = smul.addr %s503, 8
        %s505 = scalar_lea.vmem [#allocation2], %s504
        %p506 = pneg %p54
        %p507 = pneg %p51
        %s508 = sand.u32 %s33, 1
        %s509 = scalar_lea.sflag [#allocation6], %s508
        %s510 = sand.u32 %s67, 1
        %s511 = smul.addr %s510, 8
        %s512 = scalar_lea.vmem [#allocation5], %s511
        %p513 = pneg %p80
        %p514 = pneg %p77
        %s515 = sand.u32 %s33, 1
        %s516 = scalar_lea.sflag [#allocation6], %s515
        %s517 = sand.u32 %s93, 1
        %s518 = smul.addr %s517, 8
        %s519 = scalar_lea.vmem [#allocation7], %s518
        %p520 = pneg %p106
        %p521 = pneg %p103
        %p522 = pneg %p127
        %p523 = pneg %p124
        %p524 = pneg %p148
        %p525 = pneg %p145
        %p526 = pneg %p169
        %p527 = pneg %p166
        %p528 = pneg %p190
        %p529 = pneg %p187
        %p530 = pneg %p211
        %p531 = pneg %p208
        %p532 = pneg %p232
        %p533 = pneg %p229
        %p534 = pneg %p253
        %p535 = pneg %p250
        %p536 = pneg %p274
        %p537 = pneg %p271
        %p538 = pneg %p300
        %p539 = pneg %p297
        %s540 = sand.u32 %s287, 1
        %s541 = scalar_lea.sflag [#allocation4], %s540
        %s542 = sand.u32 %s287, 1
        %s543 = smul.addr %s542, 8
        %s544 = scalar_lea.vmem [#allocation14], %s543
        %v545 = vld [vmem:[%s455] sm:$0xff]
        %v546 = vld [vmem:[%s465] sm:$0xff]
        %v547 = vld [vmem:[%s475] sm:$0xff]
        %v548 = vld [vmem:[#allocation8] sm:$0xff]
        %v549 = vld [vmem:[#allocation8 + $0x8] sm:$0xff]
        %v550 = vld [vmem:[#allocation8 + $0x10] sm:$0xff]
        %v551 = vld [vmem:[#allocation8 + $0x18] sm:$0xff]
        %v552 = vld [vmem:[%s7] sm:$0x1]
        %v554 = vperm.slane %v552, 0
        %vm556 = vcmask 261120
        %v558 = vsel %vm556, %v545, 0
        %560 = vmatpush.msra.mxu0 0.0
        %561 = vmatpush.msra.mxu0 0.0
        %562 = vmatpush.msra.mxu0 0.0
        %563 = vmatpush.msra.mxu0 0.0
        %564 = vmatpush.msra.mxu0 0.0
        %565 = vmatpush.msra.mxu0 0.0
        %566 = vmatpush.msra.mxu0 0.0
        %567 = vmatpush.msra.mxu0 0.0
        %568 = vmatpush.msra.mxu0 0.0
        %569 = vmatpush.msra.mxu0 0.0
        %570 = vmatpush.msra.mxu0 0.0
        %571 = vmatpush.msra.mxu0 0.0
        %572 = vmatpush.msra.mxu0 %v551
        %573 = vmatpush.msra.mxu0 %v550
        %574 = vmatpush.msra.mxu0 %v549
        %575 = vmatpush.msra.mxu0 %v548
        %576 = vmatmul.f32.gmra.mxu0 %v558
        %v577 = vpop.f32.mrf.mxu0
        %v578 = vadd.f32 %v554, %v577
        %579 = vdwg.mxu0
        %v580 = vmul.f32 %v578, 0.5
        %v581 = vld [vmem:[#allocation10] sm:$0xff]
        %v582 = vld [vmem:[#allocation10 + $0x8] sm:$0xff]
        %v583 = vld [vmem:[#allocation10 + $0x10] sm:$0xff]
        %v584 = vld [vmem:[#allocation10 + $0x18] sm:$0xff]
        %v585 = vld [vmem:[%s8] sm:$0x1]
        %v587 = vperm.slane %v585, 0
        %v590 = vsel %vm556, %v546, 0
        %592 = vmatpush.msra.mxu0 0.0
        %593 = vmatpush.msra.mxu0 0.0
        %594 = vmatpush.msra.mxu0 0.0
        %595 = vmatpush.msra.mxu0 0.0
        %596 = vmatpush.msra.mxu0 0.0
        %597 = vmatpush.msra.mxu0 0.0
        %598 = vmatpush.msra.mxu0 0.0
        %599 = vmatpush.msra.mxu0 0.0
        %600 = vmatpush.msra.mxu0 0.0
        %601 = vmatpush.msra.mxu0 0.0
        %602 = vmatpush.msra.mxu0 0.0
        %603 = vmatpush.msra.mxu0 0.0
        %604 = vmatpush.msra.mxu0 %v584
        %605 = vmatpush.msra.mxu0 %v583
        %606 = vmatpush.msra.mxu0 %v582
        %607 = vmatpush.msra.mxu0 %v581
        %608 = vmatmul.f32.gmra.mxu0 %v590
        %v609 = vpop.f32.mrf.mxu0
        %v610 = vadd.f32 %v587, %v609
        %611 = vdwg.mxu0
        %v612 = vld [vmem:[#allocation11] sm:$0xff]
        %v613 = vld [vmem:[#allocation11 + $0x8] sm:$0xff]
        %v614 = vld [vmem:[#allocation11 + $0x10] sm:$0xff]
        %v615 = vld [vmem:[#allocation11 + $0x18] sm:$0xff]
        %v616 = vld [vmem:[%s9] sm:$0x1]
        %v618 = vperm.slane %v616, 0
        %v621 = vsel %vm556, %v547, 0
        %623 = vmatpush.msra.mxu0 0.0
        %624 = vmatpush.msra.mxu0 0.0
        %625 = vmatpush.msra.mxu0 0.0
        %626 = vmatpush.msra.mxu0 0.0
        %627 = vmatpush.msra.mxu0 0.0
        %628 = vmatpush.msra.mxu0 0.0
        %629 = vmatpush.msra.mxu0 0.0
        %630 = vmatpush.msra.mxu0 0.0
        %631 = vmatpush.msra.mxu0 0.0
        %632 = vmatpush.msra.mxu0 0.0
        %633 = vmatpush.msra.mxu0 0.0
        %634 = vmatpush.msra.mxu0 0.0
        %635 = vmatpush.msra.mxu0 %v615
        %636 = vmatpush.msra.mxu0 %v614
        %637 = vmatpush.msra.mxu0 %v613
        %638 = vmatpush.msra.mxu0 %v612
        %639 = vmatmul.f32.gmra.mxu0 %v621
        %v640 = vpop.f32.mrf.mxu0
        %v641 = vadd.f32 %v618, %v640
        %642 = vdwg.mxu0
        %v643 = vld [vmem:[#allocation13] sm:$0xff]
        %v644 = vld [vmem:[#allocation13 + $0x8] sm:$0xff]
        %v645 = vld [vmem:[#allocation13 + $0x10] sm:$0xff]
        %v646 = vld [vmem:[#allocation13 + $0x18] sm:$0xff]
        %vm647 = vcmask 31744
        %v649 = vsel %vm647, %v580, 0
        %v652 = vsel %vm647, %v610, 0
        %654 = vmatpush.xpose.msra.mxu0 0.0
        %655 = vmatpush.xpose.msra.mxu0 0.0
        %656 = vmatpush.xpose.msra.mxu0 0.0
        %657 = vmatpush.xpose.msra.mxu0 0.0
        %658 = vmatpush.xpose.msra.mxu0 0.0
        %659 = vmatpush.xpose.msra.mxu0 0.0
        %660 = vmatpush.xpose.msra.mxu0 0.0
        %661 = vmatpush.xpose.msra.mxu0 0.0
        %662 = vmatpush.xpose.msra.mxu0 0.0
        %663 = vmatpush.xpose.msra.mxu0 0.0
        %664 = vmatpush.xpose.msra.mxu0 0.0
        %665 = vmatpush.xpose.msra.mxu0 0.0
        %666 = vmatpush.xpose.msra.mxu0 0.0
        %667 = vmatpush.xpose.msra.mxu0 0.0
        %668 = vmatpush.xpose.msra.mxu0 0.0
        %669 = vmatpush.xpose.msra.mxu0 %v652
        %670 = vmatmul.f32.gmra.mxu0 %v649
        %v671 = vpop.f32.mrf.mxu0
        %v672 = vadd.f32 0.0, %v671
        %673 = vdwg.mxu0
        %vm674 = vcmask 64512
        %v675 = vsel %vm674, %v672, -inf
        %676 = vmax.xlane.f32.xlu0 %v675
        %v677 = vpop.xlane.xlu0 %676
        %v678 = vsub.f32 %v672, %v677
        %v679 = vmul.f32 %v678, 1.442695
        %v680 = vpow.pop %v679
        %v681 = vsel %vm674, %v680, 0.0
        %682 = vadd.xlane.f32.xlu0 %v681
        %v683 = vpop.xlane.xlu0 %682
        %v684 = vrcp.pop %v683
        %v685 = vmul.f32 %v683, %v684
        %v686 = vsub.f32 1.0, %v685
        %v687 = vmul.f32 %v684, %v686
        %v688 = vadd.f32 %v684, %v687
        %vm689 = vweird.f32 %v683
        %vm690 = vweird.f32 %v684
        %vm691 = vmor %vm689, %vm690
        %v692 = vsel %vm691, %v684, %v688
        %v693 = vand.u32 2147483647, %v683
        %vm694 = vcmp.eq.f32.partialorder %v693, 8.507059e+37
        %v695 = vand.u32 %v683, 2147483648
        %v696 = vor.u32 1.1754944e-38, %v695
        %v697 = vsel %vm694, %v696, %v692
        %v698 = vmul.f32 %v680, %v697
        %v700 = vsel %vm674, %v698, 0
        %702 = vmatpush.msra.mxu0 0.0
        %703 = vmatpush.msra.mxu0 0.0
        %704 = vmatpush.msra.mxu0 0.0
        %705 = vmatpush.msra.mxu0 0.0
        %706 = vmatpush.msra.mxu0 0.0
        %707 = vmatpush.msra.mxu0 0.0
        %708 = vmatpush.msra.mxu0 0.0
        %709 = vmatpush.msra.mxu0 0.0
        %710 = vmatpush.msra.mxu0 0.0
        %711 = vmatpush.msra.mxu0 0.0
        %712 = vmatpush.msra.mxu0 0.0
        %713 = vmatpush.msra.mxu0 0.0
        %714 = vmatpush.msra.mxu0 0.0
        %715 = vmatpush.msra.mxu0 0.0
        %716 = vmatpush.msra.mxu0 0.0
        %717 = vmatpush.msra.mxu0 %v641
        %718 = vmatmul.f32.gmra.mxu0 %v700
        %v719 = vpop.f32.mrf.mxu0
        %v720 = vadd.f32 0.0, %v719
        %721 = vdwg.mxu0
        %722 = vrot.lane.b32.xlu0 %v580, 124
        %v723 = vpop.permute.xlu0 %722
        %724 = vrot.lane.b32.xlu0 %v610, 124
        %v725 = vpop.permute.xlu0 %724
        %v726 = vsel %vm647, %v723, 0
        %v728 = vsel %vm647, %v725, 0
        %730 = vmatpush.xpose.msra.mxu0 0.0
        %731 = vmatpush.xpose.msra.mxu0 0.0
        %732 = vmatpush.xpose.msra.mxu0 0.0
        %733 = vmatpush.xpose.msra.mxu0 0.0
        %734 = vmatpush.xpose.msra.mxu0 0.0
        %735 = vmatpush.xpose.msra.mxu0 0.0
        %736 = vmatpush.xpose.msra.mxu0 0.0
        %737 = vmatpush.xpose.msra.mxu0 0.0
        %738 = vmatpush.xpose.msra.mxu0 0.0
        %739 = vmatpush.xpose.msra.mxu0 0.0
        %740 = vmatpush.xpose.msra.mxu0 0.0
        %741 = vmatpush.xpose.msra.mxu0 0.0
        %742 = vmatpush.xpose.msra.mxu0 0.0
        %743 = vmatpush.xpose.msra.mxu0 0.0
        %744 = vmatpush.xpose.msra.mxu0 0.0
        %745 = vmatpush.xpose.msra.mxu0 %v728
        %746 = vmatmul.f32.gmra.mxu0 %v726
        %v747 = vpop.f32.mrf.mxu0
        %v748 = vadd.f32 0.0, %v747
        %749 = vdwg.mxu0
        %v750 = vsel %vm674, %v748, -inf
        %751 = vmax.xlane.f32.xlu0 %v750
        %v752 = vpop.xlane.xlu0 %751
        %v753 = vsub.f32 %v748, %v752
        %v754 = vmul.f32 %v753, 1.442695
        %v755 = vpow.pop %v754
        %v756 = vsel %vm674, %v755, 0.0
        %757 = vadd.xlane.f32.xlu0 %v756
        %v758 = vpop.xlane.xlu0 %757
        %v759 = vrcp.pop %v758
        %v760 = vmul.f32 %v758, %v759
        %v761 = vsub.f32 1.0, %v760
        %v762 = vmul.f32 %v759, %v761
        %v763 = vadd.f32 %v759, %v762
        %vm764 = vweird.f32 %v758
        %vm765 = vweird.f32 %v759
        %vm766 = vmor %vm764, %vm765
        %v767 = vsel %vm766, %v759, %v763
        %v768 = vand.u32 2147483647, %v758
        %vm769 = vcmp.eq.f32.partialorder %v768, 8.507059e+37
        %v770 = vand.u32 %v758, 2147483648
        %v771 = vor.u32 1.1754944e-38, %v770
        %v772 = vsel %vm769, %v771, %v767
        %v773 = vmul.f32 %v755, %v772
        %775 = vrot.lane.b32.xlu0 %v641, 124
        %v776 = vpop.permute.xlu0 %775
        %v779 = vsel %vm674, %v773, 0
        %781 = vmatpush.msra.mxu0 0.0
        %782 = vmatpush.msra.mxu0 0.0
        %783 = vmatpush.msra.mxu0 0.0
        %784 = vmatpush.msra.mxu0 0.0
        %785 = vmatpush.msra.mxu0 0.0
        %786 = vmatpush.msra.mxu0 0.0
        %787 = vmatpush.msra.mxu0 0.0
        %788 = vmatpush.msra.mxu0 0.0
        %789 = vmatpush.msra.mxu0 0.0
        %790 = vmatpush.msra.mxu0 0.0
        %791 = vmatpush.msra.mxu0 0.0
        %792 = vmatpush.msra.mxu0 0.0
        %793 = vmatpush.msra.mxu0 0.0
        %794 = vmatpush.msra.mxu0 0.0
        %795 = vmatpush.msra.mxu0 0.0
        %796 = vmatpush.msra.mxu0 %v776
        %797 = vmatmul.f32.gmra.mxu0 %v779
        %v798 = vpop.f32.mrf.mxu0
        %v799 = vadd.f32 0.0, %v798
        %800 = vdwg.mxu0
        %v802 = vrot.slane %v643, 4
        %v804 = vsel %vm647, %v799, 0
        %vm806 = vcmask 1043456
        %v807 = vsel %vm806, %v802, 0
        %809 = vmatpush.msra.mxu0 0.0
        %810 = vmatpush.msra.mxu0 0.0
        %811 = vmatpush.msra.mxu0 0.0
        %812 = vmatpush.msra.mxu0 0.0
        %813 = vmatpush.msra.mxu0 0.0
        %814 = vmatpush.msra.mxu0 0.0
        %815 = vmatpush.msra.mxu0 0.0
        %816 = vmatpush.msra.mxu0 0.0
        %817 = vmatpush.msra.mxu0 0.0
        %818 = vmatpush.msra.mxu0 0.0
        %819 = vmatpush.msra.mxu0 0.0
        %820 = vmatpush.msra.mxu0 0.0
        %821 = vmatpush.msra.mxu0 0.0
        %822 = vmatpush.msra.mxu0 0.0
        %823 = vmatpush.msra.mxu0 0.0
        %824 = vmatpush.msra.mxu0 %v807
        %825 = vmatmul.f32.gmra.mxu0 %v804
        %v826 = vpop.f32.mrf.mxu0
        %v827 = vadd.f32 0.0, %v826
        %828 = vdwg.mxu0
        %v830 = vsel %vm647, %v720, 0
        %v832 = vsel %vm806, %v643, 0
        %834 = vmatpush.msra.mxu0 0.0
        %835 = vmatpush.msra.mxu0 0.0
        %836 = vmatpush.msra.mxu0 0.0
        %837 = vmatpush.msra.mxu0 0.0
        %838 = vmatpush.msra.mxu0 0.0
        %839 = vmatpush.msra.mxu0 0.0
        %840 = vmatpush.msra.mxu0 0.0
        %841 = vmatpush.msra.mxu0 0.0
        %842 = vmatpush.msra.mxu0 0.0
        %843 = vmatpush.msra.mxu0 0.0
        %844 = vmatpush.msra.mxu0 0.0
        %845 = vmatpush.msra.mxu0 0.0
        %846 = vmatpush.msra.mxu0 0.0
        %847 = vmatpush.msra.mxu0 0.0
        %848 = vmatpush.msra.mxu0 0.0
        %849 = vmatpush.msra.mxu0 %v832
        %850 = vmatmul.f32.gmra.mxu0 %v830
        %v851 = vpop.f32.mrf.mxu0
        %v852 = vadd.f32 %v827, %v851
        %853 = vdwg.mxu0
        %854 = vrot.lane.b32.xlu0 %v580, 120
        %v855 = vpop.permute.xlu0 %854
        %856 = vrot.lane.b32.xlu0 %v610, 120
        %v857 = vpop.permute.xlu0 %856
        %v858 = vsel %vm647, %v855, 0
        %v860 = vsel %vm647, %v857, 0
        %862 = vmatpush.xpose.msra.mxu0 0.0
        %863 = vmatpush.xpose.msra.mxu0 0.0
        %864 = vmatpush.xpose.msra.mxu0 0.0
        %865 = vmatpush.xpose.msra.mxu0 0.0
        %866 = vmatpush.xpose.msra.mxu0 0.0
        %867 = vmatpush.xpose.msra.mxu0 0.0
        %868 = vmatpush.xpose.msra.mxu0 0.0
        %869 = vmatpush.xpose.msra.mxu0 0.0
        %870 = vmatpush.xpose.msra.mxu0 0.0
        %871 = vmatpush.xpose.msra.mxu0 0.0
        %872 = vmatpush.xpose.msra.mxu0 0.0
        %873 = vmatpush.xpose.msra.mxu0 0.0
        %874 = vmatpush.xpose.msra.mxu0 0.0
        %875 = vmatpush.xpose.msra.mxu0 0.0
        %876 = vmatpush.xpose.msra.mxu0 0.0
        %877 = vmatpush.xpose.msra.mxu0 %v860
        %878 = vmatmul.f32.gmra.mxu0 %v858
        %v879 = vpop.f32.mrf.mxu0
        %v880 = vadd.f32 0.0, %v879
        %881 = vdwg.mxu0
        %v882 = vsel %vm674, %v880, -inf
        %883 = vmax.xlane.f32.xlu0 %v882
        %v884 = vpop.xlane.xlu0 %883
        %v885 = vsub.f32 %v880, %v884
        %v886 = vmul.f32 %v885, 1.442695
        %v887 = vpow.pop %v886
        %v888 = vsel %vm674, %v887, 0.0
        %889 = vadd.xlane.f32.xlu0 %v888
        %v890 = vpop.xlane.xlu0 %889
        %v891 = vrcp.pop %v890
        %v892 = vmul.f32 %v890, %v891
        %v893 = vsub.f32 1.0, %v892
        %v894 = vmul.f32 %v891, %v893
        %v895 = vadd.f32 %v891, %v894
        %vm896 = vweird.f32 %v890
        %vm897 = vweird.f32 %v891
        %vm898 = vmor %vm896, %vm897
        %v899 = vsel %vm898, %v891, %v895
        %v900 = vand.u32 2147483647, %v890
        %vm901 = vcmp.eq.f32.partialorder %v900, 8.507059e+37
        %v902 = vand.u32 %v890, 2147483648
        %v903 = vor.u32 1.1754944e-38, %v902
        %v904 = vsel %vm901, %v903, %v899
        %v905 = vmul.f32 %v887, %v904
        %906 = vrot.lane.b32.xlu0 %v641, 120
        %v907 = vpop.permute.xlu0 %906
        %v910 = vsel %vm674, %v905, 0
        %912 = vmatpush.msra.mxu0 0.0
        %913 = vmatpush.msra.mxu0 0.0
        %914 = vmatpush.msra.mxu0 0.0
        %915 = vmatpush.msra.mxu0 0.0
        %916 = vmatpush.msra.mxu0 0.0
        %917 = vmatpush.msra.mxu0 0.0
        %918 = vmatpush.msra.mxu0 0.0
        %919 = vmatpush.msra.mxu0 0.0
        %920 = vmatpush.msra.mxu0 0.0
        %921 = vmatpush.msra.mxu0 0.0
        %922 = vmatpush.msra.mxu0 0.0
        %923 = vmatpush.msra.mxu0 0.0
        %924 = vmatpush.msra.mxu0 0.0
        %925 = vmatpush.msra.mxu0 0.0
        %926 = vmatpush.msra.mxu0 0.0
        %927 = vmatpush.msra.mxu0 %v907
        %928 = vmatmul.f32.gmra.mxu0 %v910
        %v929 = vpop.f32.mrf.mxu0
        %v930 = vadd.f32 0.0, %v929
        %931 = vdwg.mxu0
        %v933 = vsel %vm647, %v930, 0
        %v936 = vsel %vm806, %v644, 0
        %938 = vmatpush.msra.mxu0 0.0
        %939 = vmatpush.msra.mxu0 0.0
        %940 = vmatpush.msra.mxu0 0.0
        %941 = vmatpush.msra.mxu0 0.0
        %942 = vmatpush.msra.mxu0 0.0
        %943 = vmatpush.msra.mxu0 0.0
        %944 = vmatpush.msra.mxu0 0.0
        %945 = vmatpush.msra.mxu0 0.0
        %946 = vmatpush.msra.mxu0 0.0
        %947 = vmatpush.msra.mxu0 0.0
        %948 = vmatpush.msra.mxu0 0.0
        %949 = vmatpush.msra.mxu0 0.0
        %950 = vmatpush.msra.mxu0 0.0
        %951 = vmatpush.msra.mxu0 0.0
        %952 = vmatpush.msra.mxu0 0.0
        %953 = vmatpush.msra.mxu0 %v936
        %954 = vmatmul.f32.gmra.mxu0 %v933
        %v955 = vpop.f32.mrf.mxu0
        %v956 = vadd.f32 0.0, %v955
        %957 = vdwg.mxu0
        %v958 = vadd.f32 %v852, %v956
        %959 = vrot.lane.b32.xlu0 %v580, 116
        %v960 = vpop.permute.xlu0 %959
        %961 = vrot.lane.b32.xlu0 %v610, 116
        %v962 = vpop.permute.xlu0 %961
        %v963 = vsel %vm647, %v960, 0
        %v965 = vsel %vm647, %v962, 0
        %967 = vmatpush.xpose.msra.mxu0 0.0
        %968 = vmatpush.xpose.msra.mxu0 0.0
        %969 = vmatpush.xpose.msra.mxu0 0.0
        %970 = vmatpush.xpose.msra.mxu0 0.0
        %971 = vmatpush.xpose.msra.mxu0 0.0
        %972 = vmatpush.xpose.msra.mxu0 0.0
        %973 = vmatpush.xpose.msra.mxu0 0.0
        %974 = vmatpush.xpose.msra.mxu0 0.0
        %975 = vmatpush.xpose.msra.mxu0 0.0
        %976 = vmatpush.xpose.msra.mxu0 0.0
        %977 = vmatpush.xpose.msra.mxu0 0.0
        %978 = vmatpush.xpose.msra.mxu0 0.0
        %979 = vmatpush.xpose.msra.mxu0 0.0
        %980 = vmatpush.xpose.msra.mxu0 0.0
        %981 = vmatpush.xpose.msra.mxu0 0.0
        %982 = vmatpush.xpose.msra.mxu0 %v965
        %983 = vmatmul.f32.gmra.mxu0 %v963
        %v984 = vpop.f32.mrf.mxu0
        %v985 = vadd.f32 0.0, %v984
        %986 = vdwg.mxu0
        %v987 = vsel %vm674, %v985, -inf
        %988 = vmax.xlane.f32.xlu0 %v987
        %v989 = vpop.xlane.xlu0 %988
        %v990 = vsub.f32 %v985, %v989
        %v991 = vmul.f32 %v990, 1.442695
        %v992 = vpow.pop %v991
        %v993 = vsel %vm674, %v992, 0.0
        %994 = vadd.xlane.f32.xlu0 %v993
        %v995 = vpop.xlane.xlu0 %994
        %v996 = vrcp.pop %v995
        %v997 = vmul.f32 %v995, %v996
        %v998 = vsub.f32 1.0, %v997
        %v999 = vmul.f32 %v996, %v998
        %v1000 = vadd.f32 %v996, %v999
        %vm1001 = vweird.f32 %v995
        %vm1002 = vweird.f32 %v996
        %vm1003 = vmor %vm1001, %vm1002
        %v1004 = vsel %vm1003, %v996, %v1000
        %v1005 = vand.u32 2147483647, %v995
        %vm1006 = vcmp.eq.f32.partialorder %v1005, 8.507059e+37
        %v1007 = vand.u32 %v995, 2147483648
        %v1008 = vor.u32 1.1754944e-38, %v1007
        %v1009 = vsel %vm1006, %v1008, %v1004
        %v1010 = vmul.f32 %v992, %v1009
        %1011 = vrot.lane.b32.xlu0 %v641, 116
        %v1012 = vpop.permute.xlu0 %1011
        %v1015 = vsel %vm674, %v1010, 0
        %1017 = vmatpush.msra.mxu0 0.0
        %1018 = vmatpush.msra.mxu0 0.0
        %1019 = vmatpush.msra.mxu0 0.0
        %1020 = vmatpush.msra.mxu0 0.0
        %1021 = vmatpush.msra.mxu0 0.0
        %1022 = vmatpush.msra.mxu0 0.0
        %1023 = vmatpush.msra.mxu0 0.0
        %1024 = vmatpush.msra.mxu0 0.0
        %1025 = vmatpush.msra.mxu0 0.0
        %1026 = vmatpush.msra.mxu0 0.0
        %1027 = vmatpush.msra.mxu0 0.0
        %1028 = vmatpush.msra.mxu0 0.0
        %1029 = vmatpush.msra.mxu0 0.0
        %1030 = vmatpush.msra.mxu0 0.0
        %1031 = vmatpush.msra.mxu0 0.0
        %1032 = vmatpush.msra.mxu0 %v1012
        %1033 = vmatmul.f32.gmra.mxu0 %v1015
        %v1034 = vpop.f32.mrf.mxu0
        %v1035 = vadd.f32 0.0, %v1034
        %1036 = vdwg.mxu0
        %v1037 = vrot.slane %v644, 4
        %v1039 = vsel %vm647, %v1035, 0
        %v1041 = vsel %vm806, %v1037, 0
        %1043 = vmatpush.msra.mxu0 0.0
        %1044 = vmatpush.msra.mxu0 0.0
        %1045 = vmatpush.msra.mxu0 0.0
        %1046 = vmatpush.msra.mxu0 0.0
        %1047 = vmatpush.msra.mxu0 0.0
        %1048 = vmatpush.msra.mxu0 0.0
        %1049 = vmatpush.msra.mxu0 0.0
        %1050 = vmatpush.msra.mxu0 0.0
        %1051 = vmatpush.msra.mxu0 0.0
        %1052 = vmatpush.msra.mxu0 0.0
        %1053 = vmatpush.msra.mxu0 0.0
        %1054 = vmatpush.msra.mxu0 0.0
        %1055 = vmatpush.msra.mxu0 0.0
        %1056 = vmatpush.msra.mxu0 0.0
        %1057 = vmatpush.msra.mxu0 0.0
        %1058 = vmatpush.msra.mxu0 %v1041
        %1059 = vmatmul.f32.gmra.mxu0 %v1039
        %v1060 = vpop.f32.mrf.mxu0
        %v1061 = vadd.f32 0.0, %v1060
        %1062 = vdwg.mxu0
        %v1063 = vadd.f32 %v958, %v1061
        %1064 = vrot.lane.b32.xlu0 %v580, 112
        %v1065 = vpop.permute.xlu0 %1064
        %1066 = vrot.lane.b32.xlu0 %v610, 112
        %v1067 = vpop.permute.xlu0 %1066
        %v1068 = vsel %vm647, %v1065, 0
        %v1070 = vsel %vm647, %v1067, 0
        %1072 = vmatpush.xpose.msra.mxu0 0.0
        %1073 = vmatpush.xpose.msra.mxu0 0.0
        %1074 = vmatpush.xpose.msra.mxu0 0.0
        %1075 = vmatpush.xpose.msra.mxu0 0.0
        %1076 = vmatpush.xpose.msra.mxu0 0.0
        %1077 = vmatpush.xpose.msra.mxu0 0.0
        %1078 = vmatpush.xpose.msra.mxu0 0.0
        %1079 = vmatpush.xpose.msra.mxu0 0.0
        %1080 = vmatpush.xpose.msra.mxu0 0.0
        %1081 = vmatpush.xpose.msra.mxu0 0.0
        %1082 = vmatpush.xpose.msra.mxu0 0.0
        %1083 = vmatpush.xpose.msra.mxu0 0.0
        %1084 = vmatpush.xpose.msra.mxu0 0.0
        %1085 = vmatpush.xpose.msra.mxu0 0.0
        %1086 = vmatpush.xpose.msra.mxu0 0.0
        %1087 = vmatpush.xpose.msra.mxu0 %v1070
        %1088 = vmatmul.f32.gmra.mxu0 %v1068
        %v1089 = vpop.f32.mrf.mxu0
        %v1090 = vadd.f32 0.0, %v1089
        %1091 = vdwg.mxu0
        %v1092 = vsel %vm674, %v1090, -inf
        %1093 = vmax.xlane.f32.xlu0 %v1092
        %v1094 = vpop.xlane.xlu0 %1093
        %v1095 = vsub.f32 %v1090, %v1094
        %v1096 = vmul.f32 %v1095, 1.442695
        %v1097 = vpow.pop %v1096
        %v1098 = vsel %vm674, %v1097, 0.0
        %1099 = vadd.xlane.f32.xlu0 %v1098
        %v1100 = vpop.xlane.xlu0 %1099
        %v1101 = vrcp.pop %v1100
        %v1102 = vmul.f32 %v1100, %v1101
        %v1103 = vsub.f32 1.0, %v1102
        %v1104 = vmul.f32 %v1101, %v1103
        %v1105 = vadd.f32 %v1101, %v1104
        %vm1106 = vweird.f32 %v1100
        %vm1107 = vweird.f32 %v1101
        %vm1108 = vmor %vm1106, %vm1107
        %v1109 = vsel %vm1108, %v1101, %v1105
        %v1110 = vand.u32 2147483647, %v1100
        %vm1111 = vcmp.eq.f32.partialorder %v1110, 8.507059e+37
        %v1112 = vand.u32 %v1100, 2147483648
        %v1113 = vor.u32 1.1754944e-38, %v1112
        %v1114 = vsel %vm1111, %v1113, %v1109
        %v1115 = vmul.f32 %v1097, %v1114
        %1116 = vrot.lane.b32.xlu0 %v641, 112
        %v1117 = vpop.permute.xlu0 %1116
        %v1120 = vsel %vm674, %v1115, 0
        %1122 = vmatpush.msra.mxu0 0.0
        %1123 = vmatpush.msra.mxu0 0.0
        %1124 = vmatpush.msra.mxu0 0.0
        %1125 = vmatpush.msra.mxu0 0.0
        %1126 = vmatpush.msra.mxu0 0.0
        %1127 = vmatpush.msra.mxu0 0.0
        %1128 = vmatpush.msra.mxu0 0.0
        %1129 = vmatpush.msra.mxu0 0.0
        %1130 = vmatpush.msra.mxu0 0.0
        %1131 = vmatpush.msra.mxu0 0.0
        %1132 = vmatpush.msra.mxu0 0.0
        %1133 = vmatpush.msra.mxu0 0.0
        %1134 = vmatpush.msra.mxu0 0.0
        %1135 = vmatpush.msra.mxu0 0.0
        %1136 = vmatpush.msra.mxu0 0.0
        %1137 = vmatpush.msra.mxu0 %v1117
        %1138 = vmatmul.f32.gmra.mxu0 %v1120
        %v1139 = vpop.f32.mrf.mxu0
        %v1140 = vadd.f32 0.0, %v1139
        %1141 = vdwg.mxu0
        %v1143 = vsel %vm647, %v1140, 0
        %v1146 = vsel %vm806, %v645, 0
        %1148 = vmatpush.msra.mxu0 0.0
        %1149 = vmatpush.msra.mxu0 0.0
        %1150 = vmatpush.msra.mxu0 0.0
        %1151 = vmatpush.msra.mxu0 0.0
        %1152 = vmatpush.msra.mxu0 0.0
        %1153 = vmatpush.msra.mxu0 0.0
        %1154 = vmatpush.msra.mxu0 0.0
        %1155 = vmatpush.msra.mxu0 0.0
        %1156 = vmatpush.msra.mxu0 0.0
        %1157 = vmatpush.msra.mxu0 0.0
        %1158 = vmatpush.msra.mxu0 0.0
        %1159 = vmatpush.msra.mxu0 0.0
        %1160 = vmatpush.msra.mxu0 0.0
        %1161 = vmatpush.msra.mxu0 0.0
        %1162 = vmatpush.msra.mxu0 0.0
        %1163 = vmatpush.msra.mxu0 %v1146
        %1164 = vmatmul.f32.gmra.mxu0 %v1143
        %v1165 = vpop.f32.mrf.mxu0
        %v1166 = vadd.f32 0.0, %v1165
        %1167 = vdwg.mxu0
        %v1168 = vadd.f32 %v1063, %v1166
        %1169 = vrot.lane.b32.xlu0 %v580, 108
        %v1170 = vpop.permute.xlu0 %1169
        %1171 = vrot.lane.b32.xlu0 %v610, 108
        %v1172 = vpop.permute.xlu0 %1171
        %v1173 = vsel %vm647, %v1170, 0
        %v1175 = vsel %vm647, %v1172, 0
        %1177 = vmatpush.xpose.msra.mxu0 0.0
        %1178 = vmatpush.xpose.msra.mxu0 0.0
        %1179 = vmatpush.xpose.msra.mxu0 0.0
        %1180 = vmatpush.xpose.msra.mxu0 0.0
        %1181 = vmatpush.xpose.msra.mxu0 0.0
        %1182 = vmatpush.xpose.msra.mxu0 0.0
        %1183 = vmatpush.xpose.msra.mxu0 0.0
        %1184 = vmatpush.xpose.msra.mxu0 0.0
        %1185 = vmatpush.xpose.msra.mxu0 0.0
        %1186 = vmatpush.xpose.msra.mxu0 0.0
        %1187 = vmatpush.xpose.msra.mxu0 0.0
        %1188 = vmatpush.xpose.msra.mxu0 0.0
        %1189 = vmatpush.xpose.msra.mxu0 0.0
        %1190 = vmatpush.xpose.msra.mxu0 0.0
        %1191 = vmatpush.xpose.msra.mxu0 0.0
        %1192 = vmatpush.xpose.msra.mxu0 %v1175
        %1193 = vmatmul.f32.gmra.mxu0 %v1173
        %v1194 = vpop.f32.mrf.mxu0
        %v1195 = vadd.f32 0.0, %v1194
        %1196 = vdwg.mxu0
        %v1197 = vsel %vm674, %v1195, -inf
        %1198 = vmax.xlane.f32.xlu0 %v1197
        %v1199 = vpop.xlane.xlu0 %1198
        %v1200 = vsub.f32 %v1195, %v1199
        %v1201 = vmul.f32 %v1200, 1.442695
        %v1202 = vpow.pop %v1201
        %v1203 = vsel %vm674, %v1202, 0.0
        %1204 = vadd.xlane.f32.xlu0 %v1203
        %v1205 = vpop.xlane.xlu0 %1204
        %v1206 = vrcp.pop %v1205
        %v1207 = vmul.f32 %v1205, %v1206
        %v1208 = vsub.f32 1.0, %v1207
        %v1209 = vmul.f32 %v1206, %v1208
        %v1210 = vadd.f32 %v1206, %v1209
        %vm1211 = vweird.f32 %v1205
        %vm1212 = vweird.f32 %v1206
        %vm1213 = vmor %vm1211, %vm1212
        %v1214 = vsel %vm1213, %v1206, %v1210
        %v1215 = vand.u32 2147483647, %v1205
        %vm1216 = vcmp.eq.f32.partialorder %v1215, 8.507059e+37
        %v1217 = vand.u32 %v1205, 2147483648
        %v1218 = vor.u32 1.1754944e-38, %v1217
        %v1219 = vsel %vm1216, %v1218, %v1214
        %v1220 = vmul.f32 %v1202, %v1219
        %1221 = vrot.lane.b32.xlu0 %v641, 108
        %v1222 = vpop.permute.xlu0 %1221
        %v1225 = vsel %vm674, %v1220, 0
        %1227 = vmatpush.msra.mxu0 0.0
        %1228 = vmatpush.msra.mxu0 0.0
        %1229 = vmatpush.msra.mxu0 0.0
        %1230 = vmatpush.msra.mxu0 0.0
        %1231 = vmatpush.msra.mxu0 0.0
        %1232 = vmatpush.msra.mxu0 0.0
        %1233 = vmatpush.msra.mxu0 0.0
        %1234 = vmatpush.msra.mxu0 0.0
        %1235 = vmatpush.msra.mxu0 0.0
        %1236 = vmatpush.msra.mxu0 0.0
        %1237 = vmatpush.msra.mxu0 0.0
        %1238 = vmatpush.msra.mxu0 0.0
        %1239 = vmatpush.msra.mxu0 0.0
        %1240 = vmatpush.msra.mxu0 0.0
        %1241 = vmatpush.msra.mxu0 0.0
        %1242 = vmatpush.msra.mxu0 %v1222
        %1243 = vmatmul.f32.gmra.mxu0 %v1225
        %v1244 = vpop.f32.mrf.mxu0
        %v1245 = vadd.f32 0.0, %v1244
        %1246 = vdwg.mxu0
        %v1247 = vrot.slane %v645, 4
        %v1249 = vsel %vm647, %v1245, 0
        %v1251 = vsel %vm806, %v1247, 0
        %1253 = vmatpush.msra.mxu0 0.0
        %1254 = vmatpush.msra.mxu0 0.0
        %1255 = vmatpush.msra.mxu0 0.0
        %1256 = vmatpush.msra.mxu0 0.0
        %1257 = vmatpush.msra.mxu0 0.0
        %1258 = vmatpush.msra.mxu0 0.0
        %1259 = vmatpush.msra.mxu0 0.0
        %1260 = vmatpush.msra.mxu0 0.0
        %1261 = vmatpush.msra.mxu0 0.0
        %1262 = vmatpush.msra.mxu0 0.0
        %1263 = vmatpush.msra.mxu0 0.0
        %1264 = vmatpush.msra.mxu0 0.0
        %1265 = vmatpush.msra.mxu0 0.0
        %1266 = vmatpush.msra.mxu0 0.0
        %1267 = vmatpush.msra.mxu0 0.0
        %1268 = vmatpush.msra.mxu0 %v1251
        %1269 = vmatmul.f32.gmra.mxu0 %v1249
        %v1270 = vpop.f32.mrf.mxu0
        %v1271 = vadd.f32 0.0, %v1270
        %1272 = vdwg.mxu0
        %v1273 = vadd.f32 %v1168, %v1271
        %1274 = vrot.lane.b32.xlu0 %v580, 104
        %v1275 = vpop.permute.xlu0 %1274
        %1276 = vrot.lane.b32.xlu0 %v610, 104
        %v1277 = vpop.permute.xlu0 %1276
        %v1278 = vsel %vm647, %v1275, 0
        %v1280 = vsel %vm647, %v1277, 0
        %1282 = vmatpush.xpose.msra.mxu0 0.0
        %1283 = vmatpush.xpose.msra.mxu0 0.0
        %1284 = vmatpush.xpose.msra.mxu0 0.0
        %1285 = vmatpush.xpose.msra.mxu0 0.0
        %1286 = vmatpush.xpose.msra.mxu0 0.0
        %1287 = vmatpush.xpose.msra.mxu0 0.0
        %1288 = vmatpush.xpose.msra.mxu0 0.0
        %1289 = vmatpush.xpose.msra.mxu0 0.0
        %1290 = vmatpush.xpose.msra.mxu0 0.0
        %1291 = vmatpush.xpose.msra.mxu0 0.0
        %1292 = vmatpush.xpose.msra.mxu0 0.0
        %1293 = vmatpush.xpose.msra.mxu0 0.0
        %1294 = vmatpush.xpose.msra.mxu0 0.0
        %1295 = vmatpush.xpose.msra.mxu0 0.0
        %1296 = vmatpush.xpose.msra.mxu0 0.0
        %1297 = vmatpush.xpose.msra.mxu0 %v1280
        %1298 = vmatmul.f32.gmra.mxu0 %v1278
        %v1299 = vpop.f32.mrf.mxu0
        %v1300 = vadd.f32 0.0, %v1299
        %1301 = vdwg.mxu0
        %v1302 = vsel %vm674, %v1300, -inf
        %1303 = vmax.xlane.f32.xlu0 %v1302
        %v1304 = vpop.xlane.xlu0 %1303
        %v1305 = vsub.f32 %v1300, %v1304
        %v1306 = vmul.f32 %v1305, 1.442695
        %v1307 = vpow.pop %v1306
        %v1308 = vsel %vm674, %v1307, 0.0
        %1309 = vadd.xlane.f32.xlu0 %v1308
        %v1310 = vpop.xlane.xlu0 %1309
        %v1311 = vrcp.pop %v1310
        %v1312 = vmul.f32 %v1310, %v1311
        %v1313 = vsub.f32 1.0, %v1312
        %v1314 = vmul.f32 %v1311, %v1313
        %v1315 = vadd.f32 %v1311, %v1314
        %vm1316 = vweird.f32 %v1310
        %vm1317 = vweird.f32 %v1311
        %vm1318 = vmor %vm1316, %vm1317
        %v1319 = vsel %vm1318, %v1311, %v1315
        %v1320 = vand.u32 2147483647, %v1310
        %vm1321 = vcmp.eq.f32.partialorder %v1320, 8.507059e+37
        %v1322 = vand.u32 %v1310, 2147483648
        %v1323 = vor.u32 1.1754944e-38, %v1322
        %v1324 = vsel %vm1321, %v1323, %v1319
        %v1325 = vmul.f32 %v1307, %v1324
        %1326 = vrot.lane.b32.xlu0 %v641, 104
        %v1327 = vpop.permute.xlu0 %1326
        %v1330 = vsel %vm674, %v1325, 0
        %1332 = vmatpush.msra.mxu0 0.0
        %1333 = vmatpush.msra.mxu0 0.0
        %1334 = vmatpush.msra.mxu0 0.0
        %1335 = vmatpush.msra.mxu0 0.0
        %1336 = vmatpush.msra.mxu0 0.0
        %1337 = vmatpush.msra.mxu0 0.0
        %1338 = vmatpush.msra.mxu0 0.0
        %1339 = vmatpush.msra.mxu0 0.0
        %1340 = vmatpush.msra.mxu0 0.0
        %1341 = vmatpush.msra.mxu0 0.0
        %1342 = vmatpush.msra.mxu0 0.0
        %1343 = vmatpush.msra.mxu0 0.0
        %1344 = vmatpush.msra.mxu0 0.0
        %1345 = vmatpush.msra.mxu0 0.0
        %1346 = vmatpush.msra.mxu0 0.0
        %1347 = vmatpush.msra.mxu0 %v1327
        %1348 = vmatmul.f32.gmra.mxu0 %v1330
        %v1349 = vpop.f32.mrf.mxu0
        %v1350 = vadd.f32 0.0, %v1349
        %1351 = vdwg.mxu0
        %v1353 = vsel %vm647, %v1350, 0
        %v1356 = vsel %vm806, %v646, 0
        %1358 = vmatpush.msra.mxu0 0.0
        %1359 = vmatpush.msra.mxu0 0.0
        %1360 = vmatpush.msra.mxu0 0.0
        %1361 = vmatpush.msra.mxu0 0.0
        %1362 = vmatpush.msra.mxu0 0.0
        %1363 = vmatpush.msra.mxu0 0.0
        %1364 = vmatpush.msra.mxu0 0.0
        %1365 = vmatpush.msra.mxu0 0.0
        %1366 = vmatpush.msra.mxu0 0.0
        %1367 = vmatpush.msra.mxu0 0.0
        %1368 = vmatpush.msra.mxu0 0.0
        %1369 = vmatpush.msra.mxu0 0.0
        %1370 = vmatpush.msra.mxu0 0.0
        %1371 = vmatpush.msra.mxu0 0.0
        %1372 = vmatpush.msra.mxu0 0.0
        %1373 = vmatpush.msra.mxu0 %v1356
        %1374 = vmatmul.f32.gmra.mxu0 %v1353
        %v1375 = vpop.f32.mrf.mxu0
        %v1376 = vadd.f32 0.0, %v1375
        %1377 = vdwg.mxu0
        %v1378 = vadd.f32 %v1273, %v1376
        %1379 = vrot.lane.b32.xlu0 %v580, 100
        %v1380 = vpop.permute.xlu0 %1379
        %1381 = vrot.lane.b32.xlu0 %v610, 100
        %v1382 = vpop.permute.xlu0 %1381
        %v1383 = vsel %vm647, %v1380, 0
        %v1385 = vsel %vm647, %v1382, 0
        %1387 = vmatpush.xpose.msra.mxu0 0.0
        %1388 = vmatpush.xpose.msra.mxu0 0.0
        %1389 = vmatpush.xpose.msra.mxu0 0.0
        %1390 = vmatpush.xpose.msra.mxu0 0.0
        %1391 = vmatpush.xpose.msra.mxu0 0.0
        %1392 = vmatpush.xpose.msra.mxu0 0.0
        %1393 = vmatpush.xpose.msra.mxu0 0.0
        %1394 = vmatpush.xpose.msra.mxu0 0.0
        %1395 = vmatpush.xpose.msra.mxu0 0.0
        %1396 = vmatpush.xpose.msra.mxu0 0.0
        %1397 = vmatpush.xpose.msra.mxu0 0.0
        %1398 = vmatpush.xpose.msra.mxu0 0.0
        %1399 = vmatpush.xpose.msra.mxu0 0.0
        %1400 = vmatpush.xpose.msra.mxu0 0.0
        %1401 = vmatpush.xpose.msra.mxu0 0.0
        %1402 = vmatpush.xpose.msra.mxu0 %v1385
        %1403 = vmatmul.f32.gmra.mxu0 %v1383
        %v1404 = vpop.f32.mrf.mxu0
        %v1405 = vadd.f32 0.0, %v1404
        %1406 = vdwg.mxu0
        %v1407 = vsel %vm674, %v1405, -inf
        %1408 = vmax.xlane.f32.xlu0 %v1407
        %v1409 = vpop.xlane.xlu0 %1408
        %v1410 = vsub.f32 %v1405, %v1409
        %v1411 = vmul.f32 %v1410, 1.442695
        %v1412 = vpow.pop %v1411
        %v1413 = vsel %vm674, %v1412, 0.0
        %1414 = vadd.xlane.f32.xlu0 %v1413
        %v1415 = vpop.xlane.xlu0 %1414
        %v1416 = vrcp.pop %v1415
        %v1417 = vmul.f32 %v1415, %v1416
        %v1418 = vsub.f32 1.0, %v1417
        %v1419 = vmul.f32 %v1416, %v1418
        %v1420 = vadd.f32 %v1416, %v1419
        %vm1421 = vweird.f32 %v1415
        %vm1422 = vweird.f32 %v1416
        %vm1423 = vmor %vm1421, %vm1422
        %v1424 = vsel %vm1423, %v1416, %v1420
        %v1425 = vand.u32 2147483647, %v1415
        %vm1426 = vcmp.eq.f32.partialorder %v1425, 8.507059e+37
        %v1427 = vand.u32 %v1415, 2147483648
        %v1428 = vor.u32 1.1754944e-38, %v1427
        %v1429 = vsel %vm1426, %v1428, %v1424
        %v1430 = vmul.f32 %v1412, %v1429
        %1431 = vrot.lane.b32.xlu0 %v641, 100
        %v1432 = vpop.permute.xlu0 %1431
        %v1435 = vsel %vm674, %v1430, 0
        %1437 = vmatpush.msra.mxu0 0.0
        %1438 = vmatpush.msra.mxu0 0.0
        %1439 = vmatpush.msra.mxu0 0.0
        %1440 = vmatpush.msra.mxu0 0.0
        %1441 = vmatpush.msra.mxu0 0.0
        %1442 = vmatpush.msra.mxu0 0.0
        %1443 = vmatpush.msra.mxu0 0.0
        %1444 = vmatpush.msra.mxu0 0.0
        %1445 = vmatpush.msra.mxu0 0.0
        %1446 = vmatpush.msra.mxu0 0.0
        %1447 = vmatpush.msra.mxu0 0.0
        %1448 = vmatpush.msra.mxu0 0.0
        %1449 = vmatpush.msra.mxu0 0.0
        %1450 = vmatpush.msra.mxu0 0.0
        %1451 = vmatpush.msra.mxu0 0.0
        %1452 = vmatpush.msra.mxu0 %v1432
        %1453 = vmatmul.f32.gmra.mxu0 %v1435
        %v1454 = vpop.f32.mrf.mxu0
        %v1455 = vadd.f32 0.0, %v1454
        %1456 = vdwg.mxu0
        %v1457 = vrot.slane %v646, 4
        %v1459 = vsel %vm647, %v1455, 0
        %v1461 = vsel %vm806, %v1457, 0
        %1463 = vmatpush.msra.mxu0 0.0
        %1464 = vmatpush.msra.mxu0 0.0
        %1465 = vmatpush.msra.mxu0 0.0
        %1466 = vmatpush.msra.mxu0 0.0
        %1467 = vmatpush.msra.mxu0 0.0
        %1468 = vmatpush.msra.mxu0 0.0
        %1469 = vmatpush.msra.mxu0 0.0
        %1470 = vmatpush.msra.mxu0 0.0
        %1471 = vmatpush.msra.mxu0 0.0
        %1472 = vmatpush.msra.mxu0 0.0
        %1473 = vmatpush.msra.mxu0 0.0
        %1474 = vmatpush.msra.mxu0 0.0
        %1475 = vmatpush.msra.mxu0 0.0
        %1476 = vmatpush.msra.mxu0 0.0
        %1477 = vmatpush.msra.mxu0 0.0
        %1478 = vmatpush.msra.mxu0 %v1461
        %1479 = vmatmul.f32.gmra.mxu0 %v1459
        %v1480 = vpop.f32.mrf.mxu0
        %v1481 = vadd.f32 0.0, %v1480
        %1482 = vdwg.mxu0
        %v1483 = vadd.f32 %v1378, %v1481
        %v1484 = vld [vmem:[%s10] sm:$0x1]
        %v1486 = vperm.slane %v1484, 0
        %v1488 = vadd.f32 %v1483, %v1486
        %1489 = vst.msk [vmem:[%s544] sm:$0xff] %vm556, %v1488
        %s1490 = sand.u32 %s287, 1
        %s1491 = scalar_lea.sflag [#allocation4], %s1490
        %s1492 = sand.u32 %s287, 1
        %s1493 = smul.addr %s1492, 8
        %s1494 = scalar_lea.vmem [#allocation14], %s1493
        // Predicated region
        $region93: #{tpu_custom_call.1} parent=63 // pred_check
          %p1495 = pneg %p297
        $region94: #{tpu_custom_call.1} parent=63 // pred_check_branch
          %1497 = sbr.rel (%p1495) target = $region96
        $region95: #{tpu_custom_call.1} parent=63 // pred_region
          %1499 = vsyncadd %s1491, 0
          %s1500 = smul.addr %s33, 8
          %s1501 = scalar_lea.hbm %s11, %s1500
          %s1503 = sshll.u32 %s1494, 4
          %s1504 = int_to_ptr.vmem [resolvable:$true] %s1503
          %s1505 = sshll.u32 %s1501, 4
          %s1506 = int_to_ptr.hbm [resolvable:$true] %s1505
          %1508 = dma.vmem_to_hbm [thread:$0]  %s1504, 128, %s1506, %s1491
        $region96: #{tpu_custom_call.1} parent=63 // pred_fallthru
          _
      $region64: #{tpu_custom_call.1} parent=5 // pred_fallthru
        _
      %p1509 = scmp.le.s32.totalorder 2, %s28
      // Predicated region
      $region97: #{tpu_custom_call.1} parent=5 // pred_check
        %p1510 = pneg %p1509
      $region98: #{tpu_custom_call.1} parent=5 // pred_check_branch
        %1512 = sbr.rel (%p1510) target = $region100
      $region99: #{tpu_custom_call.1} parent=5 // pred_region
        %s1513 = ssub.s32 %s28, 2
        // Predicated region
        $region101: #{tpu_custom_call.1} parent=99 // pred_check
          %p1514 = pneg %p303
        $region102: #{tpu_custom_call.1} parent=99 // pred_check_branch
          %1516 = sbr.rel (%p1514) target = $region104
        $region103: #{tpu_custom_call.1} parent=99 // pred_region
          %s1517 = sand.u32 %s288, 1
          %s1518 = scalar_lea.sflag [#allocation4], %s1517
          %s1519 = sand.u32 %s288, 1
          %s1520 = smul.addr %s1519, 8
          %s1521 = scalar_lea.vmem [#allocation14], %s1520
          %1523 = dma.done %s1518, 128
        $region104: #{tpu_custom_call.1} parent=99 // pred_fallthru
          _
      $region100: #{tpu_custom_call.1} parent=5 // pred_fallthru
        _
    $region6: #{tpu_custom_call.1} parent=1 // loop_footer
      %s32 = sadd.s32 1, %s28
    $region7: #{tpu_custom_call.1} parent=1 // loop_footer_branch
      %27 = sbr.rel target = $region3
    $region8: #{tpu_custom_call.1} parent=1 // loop_exit
      _
    %1524 = vsyncpa [#allocation3], 1
    %s1525 = scalar_lea.sflag [#allocation3], 1
    %1526 = vsyncpa %s1525, 1
    %1527 = vsyncpa [#allocation6], 1
    %s1528 = scalar_lea.sflag [#allocation6], 1
    %1529 = vsyncpa %s1528, 1
    %1530 = vsyncpa [#allocation9], 1
    %1531 = vsyncpa [#allocation12], 1
    %1532 = vsyncpa [#allocation4], 1
    %s1533 = scalar_lea.sflag [#allocation4], 1
    %1534 = vsyncpa %s1533, 1

</llo_original>
